<compile_context>
chip_gen: v7x
topology: tpu7x:2x2x1
jax: 0.10.0
libtpu: 0.0.40
codegen_flags: <defaults>
</compile_context>

<pallas_src>
import jax
import jax.numpy as jnp
from jax import lax
from jax.experimental import pallas as pl
from jax.experimental.pallas import tpu as pltpu

BLOCK_SIZE = 3        # makemore context length
VOCAB_SIZE = 26       # names.txt -> lowercase 'a'..'z'
HIDDEN = 200
HID_PAD = 256         # padded hidden (sublane/K dense)
V_PAD = 32            # padded vocab for the one-hot / table K dim
OUT_PAD = 128         # padded logits rows (lane-dense output, >= VOCAB_SIZE)
BN_EPS = 1e-5


def _mlp_kernel(x_ref, tab_ref, scale_ref, shift_ref, w2t_ref, b2t_ref, o_ref):
    """Single pass per batch tile.  All tensors are transposed: batch on lanes.

    x_ref     : (BLOCK_SIZE, tile)        int32 indices
    tab_ref   : (BLOCK_SIZE, HID_PAD, V_PAD) bf16 lookup tables (T_p^T, b1 folded)
    scale_ref : (HID_PAD, 1) f32 fused BN scale   (gamma / sqrt(var+eps))
    shift_ref : (HID_PAD, 1) f32 fused BN shift   (beta - mu*scale)
    w2t_ref   : (OUT_PAD, HID_PAD) bf16  (W2^T, zero padded)
    b2t_ref   : (OUT_PAD, 1) f32
    o_ref     : (OUT_PAD, tile) f32 padded logits (transposed)
    """
    tile = x_ref.shape[1]
    xv = x_ref[...]                                            # (3, tile) i32
    v_iota = lax.broadcasted_iota(jnp.int32, (V_PAD, tile), 0)

    # Embedding + Linear1 as one-hot MXU matmuls; exact bf16 products,
    # f32 accumulation.  h^T has hidden on sublanes, batch on lanes.
    h = None
    for p in range(BLOCK_SIZE):
        onehot = (v_iota == xv[p:p + 1, :]).astype(jnp.bfloat16)   # (V_PAD, tile)
        part = jnp.dot(tab_ref[p], onehot,
                       preferred_element_type=jnp.float32)         # (HID_PAD, tile)
        h = part if h is None else h + part

    # Fused BatchNorm (precomputed batch stats) + Tanh.
    # TODO(synk): on v6e/v7x the tanh input could be cast to bf16 first (EUP
    # bf16 path ~2x); kept f32 here so the same kernel is also optimal on v5e.
    t = jnp.tanh(h * scale_ref[...] + shift_ref[...])

    # Linear2 on the MXU (bf16 inputs, f32 accumulation), lane-dense output.
    o_ref[...] = (jnp.dot(w2t_ref[...], t.astype(jnp.bfloat16),
                          preferred_element_type=jnp.float32)
                  + b2t_ref[...])


def makemore_mlp_forward(x_idx, params, *, tile_b=2048):
    """x_idx: (B, block_size) int in [0, vocab). Returns logits (B, vocab) f32."""
    assert tile_b % 128 == 0
    B = x_idx.shape[0]
    n_emb = params["emb"].shape[1]
    x_idx = x_idx.astype(jnp.int32)

    # ---- Parameter-only precompute: per-position lookup tables -------------
    # T_p = emb @ W1[p*n_emb:(p+1)*n_emb, :]  -> (3, vocab, HIDDEN); b1 in T_0.
    w1r = params["w1"].reshape(BLOCK_SIZE, n_emb, HIDDEN)
    tables = jnp.einsum("ve,peh->pvh", params["emb"], w1r)
    tables = tables.at[0].add(params["b1"][0])
    tables_bf = tables.astype(jnp.bfloat16)                    # kernel precision

    # ---- BatchNorm batch statistics (true batch only, plain JAX reduce) ----
    # Uses the same bf16-quantised tables as the kernel so stats are exact
    # w.r.t. the in-kernel h.  XLA fuses gather+add+reduce; output is tiny.
    h_pre = tables_bf[0][x_idx[:, 0]].astype(jnp.float32)
    for pos in range(1, BLOCK_SIZE):
        h_pre = h_pre + tables_bf[pos][x_idx[:, pos]].astype(jnp.float32)
    mu = jnp.mean(h_pre, axis=0, keepdims=True)
    var = jnp.mean(jnp.square(h_pre - mu), axis=0, keepdims=True)  # biased
    scale = params["gamma"] / jnp.sqrt(var + BN_EPS)               # (1, HIDDEN)
    shift = params["beta"] - mu * scale

    # ---- Pad / transpose to kernel layouts (hidden on sublanes) ------------
    tab_pad = jnp.zeros((BLOCK_SIZE, HID_PAD, V_PAD), jnp.bfloat16)
    tab_pad = tab_pad.at[:, :HIDDEN, :VOCAB_SIZE].set(
        jnp.transpose(tables_bf, (0, 2, 1)))
    scale_t = jnp.zeros((HID_PAD, 1), jnp.float32).at[:HIDDEN, 0].set(scale[0])
    shift_t = jnp.zeros((HID_PAD, 1), jnp.float32).at[:HIDDEN, 0].set(shift[0])
    w2t = jnp.zeros((OUT_PAD, HID_PAD), jnp.bfloat16)
    w2t = w2t.at[:VOCAB_SIZE, :HIDDEN].set(params["w2"].T.astype(jnp.bfloat16))
    b2t = jnp.zeros((OUT_PAD, 1), jnp.float32).at[:VOCAB_SIZE, 0].set(
        params["b2"][0])

    # ---- Batch tiling: batch lives on the lane axis, 128-aligned -----------
    tile = min(tile_b, ((B + 127) // 128) * 128)
    num_tiles = -(-B // tile)
    B_pad = num_tiles * tile
    x_t = jnp.zeros((BLOCK_SIZE, B_pad), jnp.int32).at[:, :B].set(x_idx.T)

    out = pl.pallas_call(
        _mlp_kernel,
        out_shape=jax.ShapeDtypeStruct((OUT_PAD, B_pad), jnp.float32),
        grid_spec=pltpu.PrefetchScalarGridSpec(
            num_scalar_prefetch=0,
            grid=(num_tiles,),
            in_specs=[
                pl.BlockSpec((BLOCK_SIZE, tile), lambda i: (0, i)),          # x
                pl.BlockSpec((BLOCK_SIZE, HID_PAD, V_PAD),
                             lambda i: (0, 0, 0)),                           # tables
                pl.BlockSpec((HID_PAD, 1), lambda i: (0, 0)),                # scale
                pl.BlockSpec((HID_PAD, 1), lambda i: (0, 0)),                # shift
                pl.BlockSpec((OUT_PAD, HID_PAD), lambda i: (0, 0)),          # w2^T
                pl.BlockSpec((OUT_PAD, 1), lambda i: (0, 0)),                # b2^T
            ],
            out_specs=pl.BlockSpec((OUT_PAD, tile), lambda i: (0, i)),
        ),
        compiler_params=pltpu.CompilerParams(
            dimension_semantics=("parallel",),
            vmem_limit_bytes=32 * 1024 * 1024),
    )(x_t, tab_pad, scale_t, shift_t, w2t, b2t)

    return out[:VOCAB_SIZE, :B].T


def init_params(key, n_emb):
    k_emb, k_w1, k_b1, k_w2, k_b2 = jax.random.split(key, 5)
    fan_in1 = BLOCK_SIZE * n_emb
    fan_in2 = HIDDEN
    bound1 = 1.0 / jnp.sqrt(fan_in1)
    bound2 = 1.0 / jnp.sqrt(fan_in2)
    return {
        # nn.Embedding init: N(0, 1)
        "emb": jax.random.normal(k_emb, (VOCAB_SIZE, n_emb), jnp.float32),
        # nn.Linear init: U(-1/sqrt(fan_in), 1/sqrt(fan_in))
        "w1": jax.random.uniform(k_w1, (fan_in1, HIDDEN), jnp.float32,
                                 -bound1, bound1),
        "b1": jax.random.uniform(k_b1, (1, HIDDEN), jnp.float32,
                                 -bound1, bound1),
        # BatchNorm1d init: gamma=1, beta=0
        "gamma": jnp.ones((1, HIDDEN), jnp.float32),
        "beta": jnp.zeros((1, HIDDEN), jnp.float32),
        "w2": jax.random.uniform(k_w2, (HIDDEN, VOCAB_SIZE), jnp.float32,
                                 -bound2, bound2),
        "b2": jax.random.uniform(k_b2, (1, VOCAB_SIZE), jnp.float32,
                                 -bound2, bound2),
    }


if __name__ == "__main__":
    key = jax.random.PRNGKey(0)
    k_params, k_idx = jax.random.split(key)

    B = 8
    n_emb = 10

    params = init_params(k_params, n_emb)
    x_idx = jax.random.randint(k_idx, (B, BLOCK_SIZE), 0, VOCAB_SIZE,
                               dtype=jnp.int32)

    logits = makemore_mlp_forward(x_idx, params)
    jax.block_until_ready(logits)

    # Pure-JAX reference mirroring the kernel's declared mixed precision:
    # layer-1 lookup tables quantised to bf16 (f32 accumulation), f32 BN/tanh,
    # bf16-input / f32-accumulate second matmul.
    w1r = params["w1"].reshape(BLOCK_SIZE, n_emb, HIDDEN)
    tabs = jnp.einsum("ve,peh->pvh", params["emb"], w1r)
    tabs = tabs.at[0].add(params["b1"][0]).astype(jnp.bfloat16)
    h = (tabs[0][x_idx[:, 0]].astype(jnp.float32)
         + tabs[1][x_idx[:, 1]].astype(jnp.float32)
         + tabs[2][x_idx[:, 2]].astype(jnp.float32))
    mu = jnp.mean(h, axis=0, keepdims=True)
    var = jnp.mean((h - mu) ** 2, axis=0, keepdims=True)
    hn = (h - mu) / jnp.sqrt(var + BN_EPS) * params["gamma"] + params["beta"]
    t = jnp.tanh(hn)
    ref = (jnp.dot(t.astype(jnp.bfloat16), params["w2"].astype(jnp.bfloat16),
                   preferred_element_type=jnp.float32)
           + params["b2"])

    assert logits.shape == (B, VOCAB_SIZE)
    assert jnp.allclose(logits, ref, atol=2e-3, rtol=2e-3), (
        float(jnp.max(jnp.abs(logits - ref))))

    print("KERNEL_OK")
</pallas_src>

<mosaic_0001>
module attributes {stable_mosaic.version = 11 : i64} {
  func.func @_mlp_kernel(%arg0: i32, %arg1: memref<3x128xi32, #tpu.memory_space<vmem>>, %arg2: memref<3x256x32xbf16, #tpu.memory_space<vmem>>, %arg3: memref<256x1xf32, #tpu.memory_space<vmem>>, %arg4: memref<256x1xf32, #tpu.memory_space<vmem>>, %arg5: memref<128x256xbf16, #tpu.memory_space<vmem>>, %arg6: memref<128x1xf32, #tpu.memory_space<vmem>>, %arg7: memref<128x128xf32, #tpu.memory_space<vmem>>) attributes {dimension_semantics = [#tpu.dimension_semantics<parallel>], iteration_bounds = array<i64: 1>, scalar_prefetch = 0 : i64, scratch_operands = 0 : i64, tpu.core_type = #tpu.core_type<tc>, window_params = [{transform_indices = @transform_0, window_bounds = array<i64: 3, 128>}, {pipeline_mode = #tpu.pipeline_mode<synchronous>, transform_indices = @transform_1, window_bounds = array<i64: 3, 256, 32>}, {pipeline_mode = #tpu.pipeline_mode<synchronous>, transform_indices = @transform_2, window_bounds = array<i64: 256, 1>}, {pipeline_mode = #tpu.pipeline_mode<synchronous>, transform_indices = @transform_3, window_bounds = array<i64: 256, 1>}, {pipeline_mode = #tpu.pipeline_mode<synchronous>, transform_indices = @transform_4, window_bounds = array<i64: 128, 256>}, {pipeline_mode = #tpu.pipeline_mode<synchronous>, transform_indices = @transform_5, window_bounds = array<i64: 128, 1>}, {transform_indices = @transform_6, window_bounds = array<i64: 128, 128>}]} {
    %c0 = arith.constant 0 : index
    %c0_0 = arith.constant 0 : index
    %0 = vector.load %arg1[%c0, %c0_0] : memref<3x128xi32, #tpu.memory_space<vmem>>, vector<3x128xi32>
    %1 = tpu.iota {dimensions = array<i32: 0>} : vector<32x128xi32>
    %2 = vector.extract_strided_slice %0 {offsets = [0, 0], sizes = [1, 128], strides = [1, 1]} : vector<3x128xi32> to vector<1x128xi32>
    %3 = vector.broadcast %2 : vector<1x128xi32> to vector<32x128xi32>
    %4 = arith.cmpi eq, %1, %3 : vector<32x128xi32>
    %5 = arith.extui %4 : vector<32x128xi1> to vector<32x128xi32>
    %6 = arith.sitofp %5 : vector<32x128xi32> to vector<32x128xf32>
    %7 = arith.truncf %6 : vector<32x128xf32> to vector<32x128xbf16>
    %c0_1 = arith.constant 0 : index
    %c0_2 = arith.constant 0 : index
    %c0_3 = arith.constant 0 : index
    %8 = vector.load %arg2[%c0_1, %c0_2, %c0_3] : memref<3x256x32xbf16, #tpu.memory_space<vmem>>, vector<1x256x32xbf16>
    %9 = vector.shape_cast %8 : vector<1x256x32xbf16> to vector<256x32xbf16>
    %cst = arith.constant dense<0.000000e+00> : vector<256x128xf32>
    %10 = tpu.matmul %9, %7, %cst {dimension_numbers = #tpu.dot_dimension_numbers<[1], [0], [0], [1], [0, 0, 1, 1], [], []>} : vector<256x32xbf16>, vector<32x128xbf16>, vector<256x128xf32> -> vector<256x128xf32>
    %11 = vector.extract_strided_slice %0 {offsets = [1, 0], sizes = [1, 128], strides = [1, 1]} : vector<3x128xi32> to vector<1x128xi32>
    %12 = vector.broadcast %11 : vector<1x128xi32> to vector<32x128xi32>
    %13 = arith.cmpi eq, %1, %12 : vector<32x128xi32>
    %14 = arith.extui %13 : vector<32x128xi1> to vector<32x128xi32>
    %15 = arith.sitofp %14 : vector<32x128xi32> to vector<32x128xf32>
    %16 = arith.truncf %15 : vector<32x128xf32> to vector<32x128xbf16>
    %c1 = arith.constant 1 : index
    %c0_4 = arith.constant 0 : index
    %c0_5 = arith.constant 0 : index
    %17 = vector.load %arg2[%c1, %c0_4, %c0_5] : memref<3x256x32xbf16, #tpu.memory_space<vmem>>, vector<1x256x32xbf16>
    %18 = vector.shape_cast %17 : vector<1x256x32xbf16> to vector<256x32xbf16>
    %cst_6 = arith.constant dense<0.000000e+00> : vector<256x128xf32>
    %19 = tpu.matmul %18, %16, %cst_6 {dimension_numbers = #tpu.dot_dimension_numbers<[1], [0], [0], [1], [0, 0, 1, 1], [], []>} : vector<256x32xbf16>, vector<32x128xbf16>, vector<256x128xf32> -> vector<256x128xf32>
    %20 = arith.addf %10, %19 : vector<256x128xf32>
    %21 = vector.extract_strided_slice %0 {offsets = [2, 0], sizes = [1, 128], strides = [1, 1]} : vector<3x128xi32> to vector<1x128xi32>
    %22 = vector.broadcast %21 : vector<1x128xi32> to vector<32x128xi32>
    %23 = arith.cmpi eq, %1, %22 : vector<32x128xi32>
    %24 = arith.extui %23 : vector<32x128xi1> to vector<32x128xi32>
    %25 = arith.sitofp %24 : vector<32x128xi32> to vector<32x128xf32>
    %26 = arith.truncf %25 : vector<32x128xf32> to vector<32x128xbf16>
    %c2 = arith.constant 2 : index
    %c0_7 = arith.constant 0 : index
    %c0_8 = arith.constant 0 : index
    %27 = vector.load %arg2[%c2, %c0_7, %c0_8] : memref<3x256x32xbf16, #tpu.memory_space<vmem>>, vector<1x256x32xbf16>
    %28 = vector.shape_cast %27 : vector<1x256x32xbf16> to vector<256x32xbf16>
    %cst_9 = arith.constant dense<0.000000e+00> : vector<256x128xf32>
    %29 = tpu.matmul %28, %26, %cst_9 {dimension_numbers = #tpu.dot_dimension_numbers<[1], [0], [0], [1], [0, 0, 1, 1], [], []>} : vector<256x32xbf16>, vector<32x128xbf16>, vector<256x128xf32> -> vector<256x128xf32>
    %30 = arith.addf %20, %29 : vector<256x128xf32>
    %c0_10 = arith.constant 0 : index
    %c0_11 = arith.constant 0 : index
    %31 = vector.load %arg3[%c0_10, %c0_11] : memref<256x1xf32, #tpu.memory_space<vmem>>, vector<256x1xf32>
    %32 = vector.broadcast %31 : vector<256x1xf32> to vector<256x128xf32>
    %33 = arith.mulf %30, %32 : vector<256x128xf32>
    %c0_12 = arith.constant 0 : index
    %c0_13 = arith.constant 0 : index
    %34 = vector.load %arg4[%c0_12, %c0_13] : memref<256x1xf32, #tpu.memory_space<vmem>>, vector<256x1xf32>
    %35 = vector.broadcast %34 : vector<256x1xf32> to vector<256x128xf32>
    %36 = arith.addf %33, %35 : vector<256x128xf32>
    %37 = math.tanh %36 : vector<256x128xf32>
    %c0_14 = arith.constant 0 : index
    %c0_15 = arith.constant 0 : index
    %38 = vector.load %arg5[%c0_14, %c0_15] : memref<128x256xbf16, #tpu.memory_space<vmem>>, vector<128x256xbf16>
    %39 = arith.truncf %37 : vector<256x128xf32> to vector<256x128xbf16>
    %cst_16 = arith.constant dense<0.000000e+00> : vector<128x128xf32>
    %40 = tpu.matmul %38, %39, %cst_16 {dimension_numbers = #tpu.dot_dimension_numbers<[1], [0], [0], [1], [0, 0, 1, 1], [], []>} : vector<128x256xbf16>, vector<256x128xbf16>, vector<128x128xf32> -> vector<128x128xf32>
    %c0_17 = arith.constant 0 : index
    %c0_18 = arith.constant 0 : index
    %41 = vector.load %arg6[%c0_17, %c0_18] : memref<128x1xf32, #tpu.memory_space<vmem>>, vector<128x1xf32>
    %42 = vector.broadcast %41 : vector<128x1xf32> to vector<128x128xf32>
    %43 = arith.addf %40, %42 : vector<128x128xf32>
    %c0_19 = arith.constant 0 : index
    %c0_20 = arith.constant 0 : index
    %44 = vector.load %arg7[%c0_19, %c0_20] : memref<128x128xf32, #tpu.memory_space<vmem>>, vector<128x128xf32>
    tpu.vector_store %arg7[%c0_19, %c0_20], %43 {strides = array<i32>} : memref<128x128xf32, #tpu.memory_space<vmem>>, vector<128x128xf32>,
    return
  }
  func.func @transform_0(%arg0: i32) -> (i32, i32) {
    %c0_i32 = arith.constant 0 : i32
    %c0_i32_0 = arith.constant 0 : i32
    return %c0_i32, %arg0 : i32, i32
  }
  func.func @transform_1(%arg0: i32) -> (i32, i32, i32) {
    %c0_i32 = arith.constant 0 : i32
    %c0_i32_0 = arith.constant 0 : i32
    %c0_i32_1 = arith.constant 0 : i32
    %c0_i32_2 = arith.constant 0 : i32
    return %c0_i32, %c0_i32_0, %c0_i32_1 : i32, i32, i32
  }
  func.func @transform_2(%arg0: i32) -> (i32, i32) {
    %c0_i32 = arith.constant 0 : i32
    %c0_i32_0 = arith.constant 0 : i32
    %c0_i32_1 = arith.constant 0 : i32
    return %c0_i32, %c0_i32_0 : i32, i32
  }
  func.func @transform_3(%arg0: i32) -> (i32, i32) {
    %c0_i32 = arith.constant 0 : i32
    %c0_i32_0 = arith.constant 0 : i32
    %c0_i32_1 = arith.constant 0 : i32
    return %c0_i32, %c0_i32_0 : i32, i32
  }
  func.func @transform_4(%arg0: i32) -> (i32, i32) {
    %c0_i32 = arith.constant 0 : i32
    %c0_i32_0 = arith.constant 0 : i32
    %c0_i32_1 = arith.constant 0 : i32
    return %c0_i32, %c0_i32_0 : i32, i32
  }
  func.func @transform_5(%arg0: i32) -> (i32, i32) {
    %c0_i32 = arith.constant 0 : i32
    %c0_i32_0 = arith.constant 0 : i32
    %c0_i32_1 = arith.constant 0 : i32
    return %c0_i32, %c0_i32_0 : i32, i32
  }
  func.func @transform_6(%arg0: i32) -> (i32, i32) {
    %c0_i32 = arith.constant 0 : i32
    %c0_i32_0 = arith.constant 0 : i32
    return %c0_i32, %arg0 : i32, i32
  }
}

</mosaic_0001>

<llo_original>
// kernel: tpu_custom_call.1
$region0: #{tpu_custom_call.1}
  #allocation0 [shape = 'u32[]', space=smem, size = 0x4, offset = 0x4, fixed_abs, tag = 'smem constant byte address 0x4 - core index']
  #allocation1 [shape = 'u32[144,128]{1,0:T(1,128)}', space=vmem, size = 0x12000, scoped, tag = 'internal scratch']
  %s0 = inlined_call_operand.vmem [shape: s32[3,128], index: 0, kind: input, shape index: {}]
  %s1 = inlined_call_operand.vmem [shape: bf16[3,256,32], index: 1, kind: input, shape index: {}]
  %s2 = inlined_call_operand.vmem [shape: f32[256,1], index: 2, kind: input, shape index: {}]
  %s3 = inlined_call_operand.vmem [shape: f32[256,1], index: 3, kind: input, shape index: {}]
  %s4 = inlined_call_operand.vmem [shape: bf16[128,256], index: 4, kind: input, shape index: {}]
  %s5 = inlined_call_operand.vmem [shape: f32[128,1], index: 5, kind: input, shape index: {}]
  %s6 = inlined_call_operand.hbm [shape: f32[128,128], index: 6, kind: output, shape index: {}]
  %s7 = sld [smem:[#allocation0]]
  $region34: #{tpu_custom_call.1} parent=0
    _
  %s9 = ssub.s32 1, %s7
  %s10 = scalar_select 0, %s9, %s7
  $region1: #{tpu_custom_call.1} parent=0
    #allocation2 [shape = 'u8[65536]{0}', space=vmem, size = 0x10000, scoped, tag = 'output window, operand 0, single buffered']
    #allocation3 [shape = 's32[1]{0}', space=sflag, size = 0x4, scoped, tag = 'scoped memory for tpu_custom_call.1']
    %11 = vsyncpa [#allocation3], 0
    // Predicated region
    $region2: #{tpu_custom_call.1} parent=1 // pred_check
      _
    $region3: #{tpu_custom_call.1} parent=1 // pred_check_branch
      %13 = sbr.rel (0) target = $region5
    $region4: #{tpu_custom_call.1} parent=1 // pred_region
      _
    $region5: #{tpu_custom_call.1} parent=1 // pred_fallthru
      _
    // Predicated region
    $region6: #{tpu_custom_call.1} parent=1 // pred_check
      _
    $region7: #{tpu_custom_call.1} parent=1 // pred_check_branch
      %15 = sbr.rel (0) target = $region9
    $region8: #{tpu_custom_call.1} parent=1 // pred_region
      _
    $region9: #{tpu_custom_call.1} parent=1 // pred_fallthru
      _
    // Predicated region
    $region10: #{tpu_custom_call.1} parent=1 // pred_check
      _
    $region11: #{tpu_custom_call.1} parent=1 // pred_check_branch
      %17 = sbr.rel (0) target = $region13
    $region12: #{tpu_custom_call.1} parent=1 // pred_region
      _
    $region13: #{tpu_custom_call.1} parent=1 // pred_fallthru
      _
    // Predicated region
    $region14: #{tpu_custom_call.1} parent=1 // pred_check
      _
    $region15: #{tpu_custom_call.1} parent=1 // pred_check_branch
      %19 = sbr.rel (0) target = $region17
    $region16: #{tpu_custom_call.1} parent=1 // pred_region
      _
    $region17: #{tpu_custom_call.1} parent=1 // pred_fallthru
      _
    // Predicated region
    $region18: #{tpu_custom_call.1} parent=1 // pred_check
      _
    $region19: #{tpu_custom_call.1} parent=1 // pred_check_branch
      %21 = sbr.rel (0) target = $region21
    $region20: #{tpu_custom_call.1} parent=1 // pred_region
      _
    $region21: #{tpu_custom_call.1} parent=1 // pred_fallthru
      _
    // Predicated region
    $region22: #{tpu_custom_call.1} parent=1 // pred_check
      _
    $region23: #{tpu_custom_call.1} parent=1 // pred_check_branch
      %23 = sbr.rel (0) target = $region25
    $region24: #{tpu_custom_call.1} parent=1 // pred_region
      _
    $region25: #{tpu_custom_call.1} parent=1 // pred_fallthru
      _
    %v25 = vld [vmem:[%s0] sm:$0x7]
    %v26 = vlaneseq
    %v27 = vshrl.u32 %v26, 7
    %v28 = vadd.s32 %v27, 8
    %v29 = vadd.s32 %v27, 16
    %v30 = vadd.s32 %v27, 24
    %v31 = vlaneseq
    %v32 = vshrl.u32 %v31, 7
    %v33 = vsub.s32 0, %v32
    %v34 = vrot.slane %v25, %v33
    %vm35 = vcmp.eq.s32.totalorder %v27, %v34
    %vm36 = vcmp.eq.s32.totalorder %v28, %v34
    %vm37 = vcmp.eq.s32.totalorder %v29, %v34
    %vm38 = vcmp.eq.s32.totalorder %v30, %v34
    %v39 = vsel %vm35, 1, 0
    %v40 = vsel %vm36, 1, 0
    %v41 = vsel %vm37, 1, 0
    %v42 = vsel %vm38, 1, 0
    %v43 = vcvt.s32.f32 %v39
    %v44 = vcvt.s32.f32 %v40
    %v45 = vcvt.s32.f32 %v41
    %v46 = vcvt.s32.f32 %v42
    %v47 = vpack.c.bf16 %v44, %v43
    %v48 = vpack.c.bf16 %v46, %v45
    %v49 = vld [vmem:[%s1] sm:$0xf]
    %v50 = vld [vmem:[%s1 + $0x4] sm:$0xf]
    %v51 = vld [vmem:[%s1 + $0x8] sm:$0xf]
    %v52 = vld [vmem:[%s1 + $0xc] sm:$0xf]
    %v53 = vld [vmem:[%s1 + $0x10] sm:$0xf]
    %v54 = vld [vmem:[%s1 + $0x14] sm:$0xf]
    %v55 = vld [vmem:[%s1 + $0x18] sm:$0xf]
    %v56 = vld [vmem:[%s1 + $0x1c] sm:$0xf]
    %v57 = vld [vmem:[%s1 + $0x20] sm:$0xf]
    %v58 = vld [vmem:[%s1 + $0x24] sm:$0xf]
    %v59 = vld [vmem:[%s1 + $0x28] sm:$0xf]
    %v60 = vld [vmem:[%s1 + $0x2c] sm:$0xf]
    %v61 = vld [vmem:[%s1 + $0x30] sm:$0xf]
    %v62 = vld [vmem:[%s1 + $0x34] sm:$0xf]
    %v63 = vld [vmem:[%s1 + $0x38] sm:$0xf]
    %v64 = vld [vmem:[%s1 + $0x3c] sm:$0xf]
    %v65 = vld [vmem:[%s1 + $0x40] sm:$0xf]
    %v66 = vld [vmem:[%s1 + $0x44] sm:$0xf]
    %v67 = vld [vmem:[%s1 + $0x48] sm:$0xf]
    %v68 = vld [vmem:[%s1 + $0x4c] sm:$0xf]
    %v69 = vld [vmem:[%s1 + $0x50] sm:$0xf]
    %v70 = vld [vmem:[%s1 + $0x54] sm:$0xf]
    %v71 = vld [vmem:[%s1 + $0x58] sm:$0xf]
    %v72 = vld [vmem:[%s1 + $0x5c] sm:$0xf]
    %v73 = vld [vmem:[%s1 + $0x60] sm:$0xf]
    %v74 = vld [vmem:[%s1 + $0x64] sm:$0xf]
    %v75 = vld [vmem:[%s1 + $0x68] sm:$0xf]
    %v76 = vld [vmem:[%s1 + $0x6c] sm:$0xf]
    %v77 = vld [vmem:[%s1 + $0x70] sm:$0xf]
    %v78 = vld [vmem:[%s1 + $0x74] sm:$0xf]
    %v79 = vld [vmem:[%s1 + $0x78] sm:$0xf]
    %v80 = vld [vmem:[%s1 + $0x7c] sm:$0xf]
    %v81 = vlaneseq
    %v82 = vshrl.u32 %v81, 7
    %v83 = vsub.s32 1, %v82
    %v84 = vrot.slane %v25, %v83
    %vm85 = vcmp.eq.s32.totalorder %v27, %v84
    %vm86 = vcmp.eq.s32.totalorder %v28, %v84
    %vm87 = vcmp.eq.s32.totalorder %v29, %v84
    %vm88 = vcmp.eq.s32.totalorder %v30, %v84
    %v89 = vsel %vm85, 1, 0
    %v90 = vsel %vm86, 1, 0
    %v91 = vsel %vm87, 1, 0
    %v92 = vsel %vm88, 1, 0
    %v93 = vcvt.s32.f32 %v89
    %v94 = vcvt.s32.f32 %v90
    %v95 = vcvt.s32.f32 %v91
    %v96 = vcvt.s32.f32 %v92
    %v97 = vpack.c.bf16 %v94, %v93
    %v98 = vpack.c.bf16 %v96, %v95
    %s99 = scalar_lea.vmem %s1, 128
    %v100 = vld [vmem:[%s99] sm:$0xf]
    %v101 = vld [vmem:[%s99 + $0x4] sm:$0xf]
    %v102 = vld [vmem:[%s99 + $0x8] sm:$0xf]
    %v103 = vld [vmem:[%s99 + $0xc] sm:$0xf]
    %v104 = vld [vmem:[%s99 + $0x10] sm:$0xf]
    %v105 = vld [vmem:[%s99 + $0x14] sm:$0xf]
    %v106 = vld [vmem:[%s99 + $0x18] sm:$0xf]
    %v107 = vld [vmem:[%s99 + $0x1c] sm:$0xf]
    %v108 = vld [vmem:[%s99 + $0x20] sm:$0xf]
    %v109 = vld [vmem:[%s99 + $0x24] sm:$0xf]
    %v110 = vld [vmem:[%s99 + $0x28] sm:$0xf]
    %v111 = vld [vmem:[%s99 + $0x2c] sm:$0xf]
    %v112 = vld [vmem:[%s99 + $0x30] sm:$0xf]
    %v113 = vld [vmem:[%s99 + $0x34] sm:$0xf]
    %v114 = vld [vmem:[%s99 + $0x38] sm:$0xf]
    %v115 = vld [vmem:[%s99 + $0x3c] sm:$0xf]
    %v116 = vld [vmem:[%s99 + $0x40] sm:$0xf]
    %v117 = vld [vmem:[%s99 + $0x44] sm:$0xf]
    %v118 = vld [vmem:[%s99 + $0x48] sm:$0xf]
    %v119 = vld [vmem:[%s99 + $0x4c] sm:$0xf]
    %v120 = vld [vmem:[%s99 + $0x50] sm:$0xf]
    %v121 = vld [vmem:[%s99 + $0x54] sm:$0xf]
    %v122 = vld [vmem:[%s99 + $0x58] sm:$0xf]
    %v123 = vld [vmem:[%s99 + $0x5c] sm:$0xf]
    %v124 = vld [vmem:[%s99 + $0x60] sm:$0xf]
    %v125 = vld [vmem:[%s99 + $0x64] sm:$0xf]
    %v126 = vld [vmem:[%s99 + $0x68] sm:$0xf]
    %v127 = vld [vmem:[%s99 + $0x6c] sm:$0xf]
    %v128 = vld [vmem:[%s99 + $0x70] sm:$0xf]
    %v129 = vld [vmem:[%s99 + $0x74] sm:$0xf]
    %v130 = vld [vmem:[%s99 + $0x78] sm:$0xf]
    %v131 = vld [vmem:[%s99 + $0x7c] sm:$0xf]
    %v164 = vunpack.c.l.b16 %v100
    %v165 = vunpack.c.l.b16 %v101
    %v166 = vunpack.c.l.b16 %v102
    %v167 = vunpack.c.l.b16 %v103
    %v168 = vunpack.c.l.b16 %v104
    %v169 = vunpack.c.l.b16 %v105
    %v170 = vunpack.c.l.b16 %v106
    %v171 = vunpack.c.l.b16 %v107
    %v172 = vunpack.c.l.b16 %v108
    %v173 = vunpack.c.l.b16 %v109
    %v174 = vunpack.c.l.b16 %v110
    %v175 = vunpack.c.l.b16 %v111
    %v176 = vunpack.c.l.b16 %v112
    %v177 = vunpack.c.l.b16 %v113
    %v178 = vunpack.c.l.b16 %v114
    %v179 = vunpack.c.l.b16 %v115
    %v180 = vunpack.c.l.b16 %v116
    %v181 = vunpack.c.l.b16 %v117
    %v182 = vunpack.c.l.b16 %v118
    %v183 = vunpack.c.l.b16 %v119
    %v184 = vunpack.c.l.b16 %v120
    %v185 = vunpack.c.l.b16 %v121
    %v186 = vunpack.c.l.b16 %v122
    %v187 = vunpack.c.l.b16 %v123
    %v188 = vunpack.c.l.b16 %v124
    %v189 = vunpack.c.l.b16 %v125
    %v190 = vunpack.c.l.b16 %v126
    %v191 = vunpack.c.l.b16 %v127
    %v192 = vunpack.c.l.b16 %v128
    %v193 = vunpack.c.l.b16 %v129
    %v194 = vunpack.c.l.b16 %v130
    %v195 = vunpack.c.l.b16 %v131
    %v196 = vpack.c.b16 %v165, %v164
    %v197 = vpack.c.b16 %v167, %v166
    %v198 = vpack.c.b16 %v169, %v168
    %v199 = vpack.c.b16 %v171, %v170
    %v200 = vpack.c.b16 %v173, %v172
    %v201 = vpack.c.b16 %v175, %v174
    %v202 = vpack.c.b16 %v177, %v176
    %v203 = vpack.c.b16 %v179, %v178
    %v204 = vpack.c.b16 %v181, %v180
    %v205 = vpack.c.b16 %v183, %v182
    %v206 = vpack.c.b16 %v185, %v184
    %v207 = vpack.c.b16 %v187, %v186
    %v208 = vpack.c.b16 %v189, %v188
    %v209 = vpack.c.b16 %v191, %v190
    %v210 = vpack.c.b16 %v193, %v192
    %v211 = vpack.c.b16 %v195, %v194
    %vm212 = vcmask 261120
    %v214 = vsel %vm212, %v196, 0
    %v217 = vsel %vm212, %v197, 0
    %v220 = vsel %vm212, %v198, 0
    %v223 = vsel %vm212, %v199, 0
    %v226 = vsel %vm212, %v200, 0
    %v229 = vsel %vm212, %v201, 0
    %v232 = vsel %vm212, %v202, 0
    %v235 = vsel %vm212, %v203, 0
    %v238 = vsel %vm212, %v204, 0
    %v241 = vsel %vm212, %v205, 0
    %v244 = vsel %vm212, %v206, 0
    %v247 = vsel %vm212, %v207, 0
    %v250 = vsel %vm212, %v208, 0
    %v253 = vsel %vm212, %v209, 0
    %v256 = vsel %vm212, %v210, 0
    %v259 = vsel %vm212, %v211, 0
    %261 = vmatprep.subr.bf16.mxu0 0
    %262 = vmatpush1.bf16.msra.mxu0 %v97
    %263 = vmatprep.subr.bf16.mxu0 0
    %264 = vmatpush1.bf16.msra.mxu0 %v98
    %265 = vmatprep.subr.bf16.mxu0 0
    %266 = vmatpush1.bf16.msra.mxu0 0
    %267 = vmatprep.subr.bf16.mxu0 0
    %268 = vmatpush1.bf16.msra.mxu0 0
    %269 = vmatprep.subr.bf16.mxu0 0
    %270 = vmatpush1.bf16.msra.mxu0 0
    %271 = vmatprep.subr.bf16.mxu0 0
    %272 = vmatpush1.bf16.msra.mxu0 0
    %273 = vmatprep.subr.bf16.mxu0 0
    %274 = vmatpush1.bf16.msra.mxu0 0
    %275 = vmatprep.subr.bf16.mxu0 0
    %276 = vmatpush1.bf16.msra.mxu0 0
    %277 = vmatprep.subr.bf16.mxu0 0
    %278 = vmatpush1.bf16.msra.mxu0 0
    %279 = vmatprep.subr.bf16.mxu0 0
    %280 = vmatpush1.bf16.msra.mxu0 0
    %281 = vmatprep.subr.bf16.mxu0 0
    %282 = vmatpush1.bf16.msra.mxu0 0
    %283 = vmatprep.subr.bf16.mxu0 0
    %284 = vmatpush1.bf16.msra.mxu0 0
    %285 = vmatprep.subr.bf16.mxu0 0
    %286 = vmatpush1.bf16.msra.mxu0 0
    %287 = vmatprep.subr.bf16.mxu0 0
    %288 = vmatpush1.bf16.msra.mxu0 0
    %289 = vmatprep.subr.bf16.mxu0 0
    %290 = vmatpush1.bf16.msra.mxu0 0
    %291 = vmatprep.subr.bf16.mxu0 0
    %292 = vmatpush1.bf16.msra.mxu0 0
    %293 = vmatprep.mubr.bf16.mxu0 0
    %294 = vmatmul.mubr.bf16.gmra.mrb[0].mxu0 %v214
    %v295 = vpop.f32.mrb[0].mxu0
    %v296 = vadd.f32 0.0, %v295
    %v297 = vpop.f32.mrb[0].mxu0
    %v298 = vpop.f32.mrb[0].mxu0
    %v299 = vadd.f32 0.0, %v298
    %v300 = vpop.f32.mrb[0].mxu0
    %301 = vmatprep.mubr.bf16.mxu0 0
    %302 = vmatmul.mubr.bf16.gmra.mrb[0].mxu0 %v217
    %v303 = vpop.f32.mrb[0].mxu0
    %v304 = vadd.f32 0.0, %v303
    %v305 = vpop.f32.mrb[0].mxu0
    %v306 = vpop.f32.mrb[0].mxu0
    %v307 = vadd.f32 0.0, %v306
    %v308 = vpop.f32.mrb[0].mxu0
    %309 = vmatprep.mubr.bf16.mxu0 0
    %310 = vmatmul.mubr.bf16.gmra.mrb[0].mxu0 %v220
    %v311 = vpop.f32.mrb[0].mxu0
    %v312 = vadd.f32 0.0, %v311
    %v313 = vpop.f32.mrb[0].mxu0
    %v314 = vpop.f32.mrb[0].mxu0
    %v315 = vadd.f32 0.0, %v314
    %v316 = vpop.f32.mrb[0].mxu0
    %317 = vmatprep.mubr.bf16.mxu0 0
    %318 = vmatmul.mubr.bf16.gmra.mrb[0].mxu0 %v223
    %v319 = vpop.f32.mrb[0].mxu0
    %v320 = vadd.f32 0.0, %v319
    %v321 = vpop.f32.mrb[0].mxu0
    %v322 = vpop.f32.mrb[0].mxu0
    %v323 = vadd.f32 0.0, %v322
    %v324 = vpop.f32.mrb[0].mxu0
    %325 = vmatprep.mubr.bf16.mxu0 0
    %326 = vmatmul.mubr.bf16.gmra.mrb[0].mxu0 %v226
    %v327 = vpop.f32.mrb[0].mxu0
    %v328 = vadd.f32 0.0, %v327
    %v329 = vpop.f32.mrb[0].mxu0
    %v330 = vpop.f32.mrb[0].mxu0
    %v331 = vadd.f32 0.0, %v330
    %v332 = vpop.f32.mrb[0].mxu0
    %333 = vmatprep.mubr.bf16.mxu0 0
    %334 = vmatmul.mubr.bf16.gmra.mrb[0].mxu0 %v229
    %v335 = vpop.f32.mrb[0].mxu0
    %v336 = vadd.f32 0.0, %v335
    %v337 = vpop.f32.mrb[0].mxu0
    %v338 = vpop.f32.mrb[0].mxu0
    %v339 = vadd.f32 0.0, %v338
    %v340 = vpop.f32.mrb[0].mxu0
    %341 = vmatprep.mubr.bf16.mxu0 0
    %342 = vmatmul.mubr.bf16.gmra.mrb[0].mxu0 %v232
    %v343 = vpop.f32.mrb[0].mxu0
    %v344 = vadd.f32 0.0, %v343
    %v345 = vpop.f32.mrb[0].mxu0
    %v346 = vpop.f32.mrb[0].mxu0
    %v347 = vadd.f32 0.0, %v346
    %v348 = vpop.f32.mrb[0].mxu0
    %349 = vmatprep.mubr.bf16.mxu0 0
    %350 = vmatmul.mubr.bf16.gmra.mrb[0].mxu0 %v235
    %v351 = vpop.f32.mrb[0].mxu0
    %v352 = vadd.f32 0.0, %v351
    %v353 = vpop.f32.mrb[0].mxu0
    %v354 = vpop.f32.mrb[0].mxu0
    %v355 = vadd.f32 0.0, %v354
    %v356 = vpop.f32.mrb[0].mxu0
    %357 = vmatprep.mubr.bf16.mxu0 0
    %358 = vmatmul.mubr.bf16.gmra.mrb[0].mxu0 %v238
    %v359 = vpop.f32.mrb[0].mxu0
    %v360 = vadd.f32 0.0, %v359
    %v361 = vpop.f32.mrb[0].mxu0
    %v362 = vpop.f32.mrb[0].mxu0
    %v363 = vadd.f32 0.0, %v362
    %v364 = vpop.f32.mrb[0].mxu0
    %365 = vmatprep.mubr.bf16.mxu0 0
    %366 = vmatmul.mubr.bf16.gmra.mrb[0].mxu0 %v241
    %v367 = vpop.f32.mrb[0].mxu0
    %v368 = vadd.f32 0.0, %v367
    %v369 = vpop.f32.mrb[0].mxu0
    %v370 = vpop.f32.mrb[0].mxu0
    %v371 = vadd.f32 0.0, %v370
    %v372 = vpop.f32.mrb[0].mxu0
    %373 = vmatprep.mubr.bf16.mxu0 0
    %374 = vmatmul.mubr.bf16.gmra.mrb[0].mxu0 %v244
    %v375 = vpop.f32.mrb[0].mxu0
    %v376 = vadd.f32 0.0, %v375
    %v377 = vpop.f32.mrb[0].mxu0
    %v378 = vpop.f32.mrb[0].mxu0
    %v379 = vadd.f32 0.0, %v378
    %v380 = vpop.f32.mrb[0].mxu0
    %381 = vmatprep.mubr.bf16.mxu0 0
    %382 = vmatmul.mubr.bf16.gmra.mrb[0].mxu0 %v247
    %v383 = vpop.f32.mrb[0].mxu0
    %v384 = vadd.f32 0.0, %v383
    %v385 = vpop.f32.mrb[0].mxu0
    %v386 = vpop.f32.mrb[0].mxu0
    %v387 = vadd.f32 0.0, %v386
    %v388 = vpop.f32.mrb[0].mxu0
    %389 = vmatprep.mubr.bf16.mxu0 0
    %390 = vmatmul.mubr.bf16.gmra.mrb[0].mxu0 %v250
    %v391 = vpop.f32.mrb[0].mxu0
    %v392 = vadd.f32 0.0, %v391
    %v393 = vpop.f32.mrb[0].mxu0
    %v394 = vpop.f32.mrb[0].mxu0
    %v395 = vadd.f32 0.0, %v394
    %v396 = vpop.f32.mrb[0].mxu0
    %397 = vmatprep.mubr.bf16.mxu0 0
    %398 = vmatmul.mubr.bf16.gmra.mrb[0].mxu0 %v253
    %v399 = vpop.f32.mrb[0].mxu0
    %v400 = vadd.f32 0.0, %v399
    %v401 = vpop.f32.mrb[0].mxu0
    %v402 = vpop.f32.mrb[0].mxu0
    %v403 = vadd.f32 0.0, %v402
    %v404 = vpop.f32.mrb[0].mxu0
    %405 = vmatprep.mubr.bf16.mxu0 0
    %406 = vmatmul.mubr.bf16.gmra.mrb[0].mxu0 %v256
    %v407 = vpop.f32.mrb[0].mxu0
    %v408 = vadd.f32 0.0, %v407
    %v409 = vpop.f32.mrb[0].mxu0
    %v410 = vpop.f32.mrb[0].mxu0
    %v411 = vadd.f32 0.0, %v410
    %v412 = vpop.f32.mrb[0].mxu0
    %413 = vmatprep.mubr.bf16.mxu0 0
    %414 = vmatmul.mubr.bf16.gmra.mrb[0].mxu0 %v259
    %v415 = vpop.f32.mrb[0].mxu0
    %v416 = vadd.f32 0.0, %v415
    %v417 = vpop.f32.mrb[0].mxu0
    %v418 = vpop.f32.mrb[0].mxu0
    %v419 = vadd.f32 0.0, %v418
    %v420 = vpop.f32.mrb[0].mxu0
    %421 = vdwg.mxu0
    %v454 = vunpack.c.l.b16 %v49
    %v455 = vunpack.c.l.b16 %v50
    %v456 = vunpack.c.l.b16 %v51
    %v457 = vunpack.c.l.b16 %v52
    %v458 = vunpack.c.l.b16 %v53
    %v459 = vunpack.c.l.b16 %v54
    %v460 = vunpack.c.l.b16 %v55
    %v461 = vunpack.c.l.b16 %v56
    %v462 = vunpack.c.l.b16 %v57
    %v463 = vunpack.c.l.b16 %v58
    %v464 = vunpack.c.l.b16 %v59
    %v465 = vunpack.c.l.b16 %v60
    %v466 = vunpack.c.l.b16 %v61
    %v467 = vunpack.c.l.b16 %v62
    %v468 = vunpack.c.l.b16 %v63
    %v469 = vunpack.c.l.b16 %v64
    %v470 = vunpack.c.l.b16 %v65
    %v471 = vunpack.c.l.b16 %v66
    %v472 = vunpack.c.l.b16 %v67
    %v473 = vunpack.c.l.b16 %v68
    %v474 = vunpack.c.l.b16 %v69
    %v475 = vunpack.c.l.b16 %v70
    %v476 = vunpack.c.l.b16 %v71
    %v477 = vunpack.c.l.b16 %v72
    %v478 = vunpack.c.l.b16 %v73
    %v479 = vunpack.c.l.b16 %v74
    %v480 = vunpack.c.l.b16 %v75
    %v481 = vunpack.c.l.b16 %v76
    %v482 = vunpack.c.l.b16 %v77
    %v483 = vunpack.c.l.b16 %v78
    %v484 = vunpack.c.l.b16 %v79
    %v485 = vunpack.c.l.b16 %v80
    %v486 = vpack.c.b16 %v455, %v454
    %v487 = vpack.c.b16 %v457, %v456
    %v488 = vpack.c.b16 %v459, %v458
    %v489 = vpack.c.b16 %v461, %v460
    %v490 = vpack.c.b16 %v463, %v462
    %v491 = vpack.c.b16 %v465, %v464
    %v492 = vpack.c.b16 %v467, %v466
    %v493 = vpack.c.b16 %v469, %v468
    %v494 = vpack.c.b16 %v471, %v470
    %v495 = vpack.c.b16 %v473, %v472
    %v496 = vpack.c.b16 %v475, %v474
    %v497 = vpack.c.b16 %v477, %v476
    %v498 = vpack.c.b16 %v479, %v478
    %v499 = vpack.c.b16 %v481, %v480
    %v500 = vpack.c.b16 %v483, %v482
    %v501 = vpack.c.b16 %v485, %v484
    %v503 = vsel %vm212, %v486, 0
    %v506 = vsel %vm212, %v487, 0
    %v509 = vsel %vm212, %v488, 0
    %v512 = vsel %vm212, %v489, 0
    %v515 = vsel %vm212, %v490, 0
    %v518 = vsel %vm212, %v491, 0
    %v521 = vsel %vm212, %v492, 0
    %v524 = vsel %vm212, %v493, 0
    %v527 = vsel %vm212, %v494, 0
    %v530 = vsel %vm212, %v495, 0
    %v533 = vsel %vm212, %v496, 0
    %v536 = vsel %vm212, %v497, 0
    %v539 = vsel %vm212, %v498, 0
    %v542 = vsel %vm212, %v499, 0
    %v545 = vsel %vm212, %v500, 0
    %v548 = vsel %vm212, %v501, 0
    %550 = vmatprep.subr.bf16.mxu0 0
    %551 = vmatpush1.bf16.msra.mxu0 %v47
    %552 = vmatprep.subr.bf16.mxu0 0
    %553 = vmatpush1.bf16.msra.mxu0 %v48
    %554 = vmatprep.subr.bf16.mxu0 0
    %555 = vmatpush1.bf16.msra.mxu0 0
    %556 = vmatprep.subr.bf16.mxu0 0
    %557 = vmatpush1.bf16.msra.mxu0 0
    %558 = vmatprep.subr.bf16.mxu0 0
    %559 = vmatpush1.bf16.msra.mxu0 0
    %560 = vmatprep.subr.bf16.mxu0 0
    %561 = vmatpush1.bf16.msra.mxu0 0
    %562 = vmatprep.subr.bf16.mxu0 0
    %563 = vmatpush1.bf16.msra.mxu0 0
    %564 = vmatprep.subr.bf16.mxu0 0
    %565 = vmatpush1.bf16.msra.mxu0 0
    %566 = vmatprep.subr.bf16.mxu0 0
    %567 = vmatpush1.bf16.msra.mxu0 0
    %568 = vmatprep.subr.bf16.mxu0 0
    %569 = vmatpush1.bf16.msra.mxu0 0
    %570 = vmatprep.subr.bf16.mxu0 0
    %571 = vmatpush1.bf16.msra.mxu0 0
    %572 = vmatprep.subr.bf16.mxu0 0
    %573 = vmatpush1.bf16.msra.mxu0 0
    %574 = vmatprep.subr.bf16.mxu0 0
    %575 = vmatpush1.bf16.msra.mxu0 0
    %576 = vmatprep.subr.bf16.mxu0 0
    %577 = vmatpush1.bf16.msra.mxu0 0
    %578 = vmatprep.subr.bf16.mxu0 0
    %579 = vmatpush1.bf16.msra.mxu0 0
    %580 = vmatprep.subr.bf16.mxu0 0
    %581 = vmatpush1.bf16.msra.mxu0 0
    %582 = vmatprep.mubr.bf16.mxu0 0
    %583 = vmatmul.mubr.bf16.gmra.mrb[0].mxu0 %v503
    %v584 = vpop.f32.mrb[0].mxu0
    %v585 = vadd.f32 %v296, %v584
    %v586 = vpop.f32.mrb[0].mxu0
    %v587 = vpop.f32.mrb[0].mxu0
    %v588 = vadd.f32 %v299, %v587
    %v589 = vpop.f32.mrb[0].mxu0
    %590 = vmatprep.mubr.bf16.mxu0 0
    %591 = vmatmul.mubr.bf16.gmra.mrb[0].mxu0 %v506
    %v592 = vpop.f32.mrb[0].mxu0
    %v593 = vadd.f32 %v304, %v592
    %v594 = vpop.f32.mrb[0].mxu0
    %v595 = vpop.f32.mrb[0].mxu0
    %v596 = vadd.f32 %v307, %v595
    %v597 = vpop.f32.mrb[0].mxu0
    %598 = vmatprep.mubr.bf16.mxu0 0
    %599 = vmatmul.mubr.bf16.gmra.mrb[0].mxu0 %v509
    %v600 = vpop.f32.mrb[0].mxu0
    %v601 = vadd.f32 %v312, %v600
    %v602 = vpop.f32.mrb[0].mxu0
    %v603 = vpop.f32.mrb[0].mxu0
    %v604 = vadd.f32 %v315, %v603
    %v605 = vpop.f32.mrb[0].mxu0
    %606 = vmatprep.mubr.bf16.mxu0 0
    %607 = vmatmul.mubr.bf16.gmra.mrb[0].mxu0 %v512
    %v608 = vpop.f32.mrb[0].mxu0
    %v609 = vadd.f32 %v320, %v608
    %v610 = vpop.f32.mrb[0].mxu0
    %v611 = vpop.f32.mrb[0].mxu0
    %v612 = vadd.f32 %v323, %v611
    %v613 = vpop.f32.mrb[0].mxu0
    %614 = vmatprep.mubr.bf16.mxu0 0
    %615 = vmatmul.mubr.bf16.gmra.mrb[0].mxu0 %v515
    %v616 = vpop.f32.mrb[0].mxu0
    %v617 = vadd.f32 %v328, %v616
    %v618 = vpop.f32.mrb[0].mxu0
    %v619 = vpop.f32.mrb[0].mxu0
    %v620 = vadd.f32 %v331, %v619
    %v621 = vpop.f32.mrb[0].mxu0
    %622 = vmatprep.mubr.bf16.mxu0 0
    %623 = vmatmul.mubr.bf16.gmra.mrb[0].mxu0 %v518
    %v624 = vpop.f32.mrb[0].mxu0
    %v625 = vadd.f32 %v336, %v624
    %v626 = vpop.f32.mrb[0].mxu0
    %v627 = vpop.f32.mrb[0].mxu0
    %v628 = vadd.f32 %v339, %v627
    %v629 = vpop.f32.mrb[0].mxu0
    %630 = vmatprep.mubr.bf16.mxu0 0
    %631 = vmatmul.mubr.bf16.gmra.mrb[0].mxu0 %v521
    %v632 = vpop.f32.mrb[0].mxu0
    %v633 = vadd.f32 %v344, %v632
    %v634 = vpop.f32.mrb[0].mxu0
    %v635 = vpop.f32.mrb[0].mxu0
    %v636 = vadd.f32 %v347, %v635
    %v637 = vpop.f32.mrb[0].mxu0
    %638 = vmatprep.mubr.bf16.mxu0 0
    %639 = vmatmul.mubr.bf16.gmra.mrb[0].mxu0 %v524
    %v640 = vpop.f32.mrb[0].mxu0
    %v641 = vadd.f32 %v352, %v640
    %v642 = vpop.f32.mrb[0].mxu0
    %v643 = vpop.f32.mrb[0].mxu0
    %v644 = vadd.f32 %v355, %v643
    %v645 = vpop.f32.mrb[0].mxu0
    %646 = vmatprep.mubr.bf16.mxu0 0
    %647 = vmatmul.mubr.bf16.gmra.mrb[0].mxu0 %v527
    %v648 = vpop.f32.mrb[0].mxu0
    %v649 = vadd.f32 %v360, %v648
    %v650 = vpop.f32.mrb[0].mxu0
    %v651 = vpop.f32.mrb[0].mxu0
    %v652 = vadd.f32 %v363, %v651
    %v653 = vpop.f32.mrb[0].mxu0
    %654 = vmatprep.mubr.bf16.mxu0 0
    %655 = vmatmul.mubr.bf16.gmra.mrb[0].mxu0 %v530
    %v656 = vpop.f32.mrb[0].mxu0
    %v657 = vadd.f32 %v368, %v656
    %v658 = vpop.f32.mrb[0].mxu0
    %v659 = vpop.f32.mrb[0].mxu0
    %v660 = vadd.f32 %v371, %v659
    %v661 = vpop.f32.mrb[0].mxu0
    %662 = vmatprep.mubr.bf16.mxu0 0
    %663 = vmatmul.mubr.bf16.gmra.mrb[0].mxu0 %v533
    %v664 = vpop.f32.mrb[0].mxu0
    %v665 = vadd.f32 %v376, %v664
    %v666 = vpop.f32.mrb[0].mxu0
    %v667 = vpop.f32.mrb[0].mxu0
    %v668 = vadd.f32 %v379, %v667
    %v669 = vpop.f32.mrb[0].mxu0
    %670 = vmatprep.mubr.bf16.mxu0 0
    %671 = vmatmul.mubr.bf16.gmra.mrb[0].mxu0 %v536
    %v672 = vpop.f32.mrb[0].mxu0
    %v673 = vadd.f32 %v384, %v672
    %v674 = vpop.f32.mrb[0].mxu0
    %v675 = vpop.f32.mrb[0].mxu0
    %v676 = vadd.f32 %v387, %v675
    %v677 = vpop.f32.mrb[0].mxu0
    %678 = vmatprep.mubr.bf16.mxu0 0
    %679 = vmatmul.mubr.bf16.gmra.mrb[0].mxu0 %v539
    %v680 = vpop.f32.mrb[0].mxu0
    %v681 = vadd.f32 %v392, %v680
    %v682 = vpop.f32.mrb[0].mxu0
    %v683 = vpop.f32.mrb[0].mxu0
    %v684 = vadd.f32 %v395, %v683
    %v685 = vpop.f32.mrb[0].mxu0
    %686 = vmatprep.mubr.bf16.mxu0 0
    %687 = vmatmul.mubr.bf16.gmra.mrb[0].mxu0 %v542
    %v688 = vpop.f32.mrb[0].mxu0
    %v689 = vadd.f32 %v400, %v688
    %v690 = vpop.f32.mrb[0].mxu0
    %v691 = vpop.f32.mrb[0].mxu0
    %v692 = vadd.f32 %v403, %v691
    %v693 = vpop.f32.mrb[0].mxu0
    %694 = vmatprep.mubr.bf16.mxu0 0
    %695 = vmatmul.mubr.bf16.gmra.mrb[0].mxu0 %v545
    %v696 = vpop.f32.mrb[0].mxu0
    %v697 = vadd.f32 %v408, %v696
    %v698 = vpop.f32.mrb[0].mxu0
    %v699 = vpop.f32.mrb[0].mxu0
    %v700 = vadd.f32 %v411, %v699
    %v701 = vpop.f32.mrb[0].mxu0
    %702 = vmatprep.mubr.bf16.mxu0 0
    %703 = vmatmul.mubr.bf16.gmra.mrb[0].mxu0 %v548
    %v704 = vpop.f32.mrb[0].mxu0
    %v705 = vadd.f32 %v416, %v704
    %v706 = vpop.f32.mrb[0].mxu0
    %v707 = vpop.f32.mrb[0].mxu0
    %v708 = vadd.f32 %v419, %v707
    %v709 = vpop.f32.mrb[0].mxu0
    %710 = vdwg.mxu0
    %v711 = vlaneseq
    %v712 = vshrl.u32 %v711, 7
    %v713 = vsub.s32 2, %v712
    %v714 = vrot.slane %v25, %v713
    %vm715 = vcmp.eq.s32.totalorder %v27, %v714
    %vm716 = vcmp.eq.s32.totalorder %v28, %v714
    %vm717 = vcmp.eq.s32.totalorder %v29, %v714
    %vm718 = vcmp.eq.s32.totalorder %v30, %v714
    %v719 = vsel %vm715, 1, 0
    %v720 = vsel %vm716, 1, 0
    %v721 = vsel %vm717, 1, 0
    %v722 = vsel %vm718, 1, 0
    %v723 = vcvt.s32.f32 %v719
    %v724 = vcvt.s32.f32 %v720
    %v725 = vcvt.s32.f32 %v721
    %v726 = vcvt.s32.f32 %v722
    %v727 = vpack.c.bf16 %v724, %v723
    %v728 = vpack.c.bf16 %v726, %v725
    %s729 = scalar_lea.vmem %s1, 256
    %v730 = vld [vmem:[%s729] sm:$0xf]
    %v731 = vld [vmem:[%s729 + $0x4] sm:$0xf]
    %v732 = vld [vmem:[%s729 + $0x8] sm:$0xf]
    %v733 = vld [vmem:[%s729 + $0xc] sm:$0xf]
    %v734 = vld [vmem:[%s729 + $0x10] sm:$0xf]
    %v735 = vld [vmem:[%s729 + $0x14] sm:$0xf]
    %v736 = vld [vmem:[%s729 + $0x18] sm:$0xf]
    %v737 = vld [vmem:[%s729 + $0x1c] sm:$0xf]
    %v738 = vld [vmem:[%s729 + $0x20] sm:$0xf]
    %v739 = vld [vmem:[%s729 + $0x24] sm:$0xf]
    %v740 = vld [vmem:[%s729 + $0x28] sm:$0xf]
    %v741 = vld [vmem:[%s729 + $0x2c] sm:$0xf]
    %v742 = vld [vmem:[%s729 + $0x30] sm:$0xf]
    %v743 = vld [vmem:[%s729 + $0x34] sm:$0xf]
    %v744 = vld [vmem:[%s729 + $0x38] sm:$0xf]
    %v745 = vld [vmem:[%s729 + $0x3c] sm:$0xf]
    %v746 = vld [vmem:[%s729 + $0x40] sm:$0xf]
    %v747 = vld [vmem:[%s729 + $0x44] sm:$0xf]
    %v748 = vld [vmem:[%s729 + $0x48] sm:$0xf]
    %v749 = vld [vmem:[%s729 + $0x4c] sm:$0xf]
    %v750 = vld [vmem:[%s729 + $0x50] sm:$0xf]
    %v751 = vld [vmem:[%s729 + $0x54] sm:$0xf]
    %v752 = vld [vmem:[%s729 + $0x58] sm:$0xf]
    %v753 = vld [vmem:[%s729 + $0x5c] sm:$0xf]
    %v754 = vld [vmem:[%s729 + $0x60] sm:$0xf]
    %v755 = vld [vmem:[%s729 + $0x64] sm:$0xf]
    %v756 = vld [vmem:[%s729 + $0x68] sm:$0xf]
    %v757 = vld [vmem:[%s729 + $0x6c] sm:$0xf]
    %v758 = vld [vmem:[%s729 + $0x70] sm:$0xf]
    %v759 = vld [vmem:[%s729 + $0x74] sm:$0xf]
    %v760 = vld [vmem:[%s729 + $0x78] sm:$0xf]
    %v761 = vld [vmem:[%s729 + $0x7c] sm:$0xf]
    %v794 = vunpack.c.l.b16 %v730
    %v795 = vunpack.c.l.b16 %v731
    %v796 = vunpack.c.l.b16 %v732
    %v797 = vunpack.c.l.b16 %v733
    %v798 = vunpack.c.l.b16 %v734
    %v799 = vunpack.c.l.b16 %v735
    %v800 = vunpack.c.l.b16 %v736
    %v801 = vunpack.c.l.b16 %v737
    %v802 = vunpack.c.l.b16 %v738
    %v803 = vunpack.c.l.b16 %v739
    %v804 = vunpack.c.l.b16 %v740
    %v805 = vunpack.c.l.b16 %v741
    %v806 = vunpack.c.l.b16 %v742
    %v807 = vunpack.c.l.b16 %v743
    %v808 = vunpack.c.l.b16 %v744
    %v809 = vunpack.c.l.b16 %v745
    %v810 = vunpack.c.l.b16 %v746
    %v811 = vunpack.c.l.b16 %v747
    %v812 = vunpack.c.l.b16 %v748
    %v813 = vunpack.c.l.b16 %v749
    %v814 = vunpack.c.l.b16 %v750
    %v815 = vunpack.c.l.b16 %v751
    %v816 = vunpack.c.l.b16 %v752
    %v817 = vunpack.c.l.b16 %v753
    %v818 = vunpack.c.l.b16 %v754
    %v819 = vunpack.c.l.b16 %v755
    %v820 = vunpack.c.l.b16 %v756
    %v821 = vunpack.c.l.b16 %v757
    %v822 = vunpack.c.l.b16 %v758
    %v823 = vunpack.c.l.b16 %v759
    %v824 = vunpack.c.l.b16 %v760
    %v825 = vunpack.c.l.b16 %v761
    %v826 = vpack.c.b16 %v795, %v794
    %v827 = vpack.c.b16 %v797, %v796
    %v828 = vpack.c.b16 %v799, %v798
    %v829 = vpack.c.b16 %v801, %v800
    %v830 = vpack.c.b16 %v803, %v802
    %v831 = vpack.c.b16 %v805, %v804
    %v832 = vpack.c.b16 %v807, %v806
    %v833 = vpack.c.b16 %v809, %v808
    %v834 = vpack.c.b16 %v811, %v810
    %v835 = vpack.c.b16 %v813, %v812
    %v836 = vpack.c.b16 %v815, %v814
    %v837 = vpack.c.b16 %v817, %v816
    %v838 = vpack.c.b16 %v819, %v818
    %v839 = vpack.c.b16 %v821, %v820
    %v840 = vpack.c.b16 %v823, %v822
    %v841 = vpack.c.b16 %v825, %v824
    %v843 = vsel %vm212, %v826, 0
    %v846 = vsel %vm212, %v827, 0
    %v849 = vsel %vm212, %v828, 0
    %v852 = vsel %vm212, %v829, 0
    %v855 = vsel %vm212, %v830, 0
    %v858 = vsel %vm212, %v831, 0
    %v861 = vsel %vm212, %v832, 0
    %v864 = vsel %vm212, %v833, 0
    %v867 = vsel %vm212, %v834, 0
    %v870 = vsel %vm212, %v835, 0
    %v873 = vsel %vm212, %v836, 0
    %v876 = vsel %vm212, %v837, 0
    %v879 = vsel %vm212, %v838, 0
    %v882 = vsel %vm212, %v839, 0
    %v885 = vsel %vm212, %v840, 0
    %v888 = vsel %vm212, %v841, 0
    %890 = vmatprep.subr.bf16.mxu0 0
    %891 = vmatpush1.bf16.msra.mxu0 %v727
    %892 = vmatprep.subr.bf16.mxu0 0
    %893 = vmatpush1.bf16.msra.mxu0 %v728
    %894 = vmatprep.subr.bf16.mxu0 0
    %895 = vmatpush1.bf16.msra.mxu0 0
    %896 = vmatprep.subr.bf16.mxu0 0
    %897 = vmatpush1.bf16.msra.mxu0 0
    %898 = vmatprep.subr.bf16.mxu0 0
    %899 = vmatpush1.bf16.msra.mxu0 0
    %900 = vmatprep.subr.bf16.mxu0 0
    %901 = vmatpush1.bf16.msra.mxu0 0
    %902 = vmatprep.subr.bf16.mxu0 0
    %903 = vmatpush1.bf16.msra.mxu0 0
    %904 = vmatprep.subr.bf16.mxu0 0
    %905 = vmatpush1.bf16.msra.mxu0 0
    %906 = vmatprep.subr.bf16.mxu0 0
    %907 = vmatpush1.bf16.msra.mxu0 0
    %908 = vmatprep.subr.bf16.mxu0 0
    %909 = vmatpush1.bf16.msra.mxu0 0
    %910 = vmatprep.subr.bf16.mxu0 0
    %911 = vmatpush1.bf16.msra.mxu0 0
    %912 = vmatprep.subr.bf16.mxu0 0
    %913 = vmatpush1.bf16.msra.mxu0 0
    %914 = vmatprep.subr.bf16.mxu0 0
    %915 = vmatpush1.bf16.msra.mxu0 0
    %916 = vmatprep.subr.bf16.mxu0 0
    %917 = vmatpush1.bf16.msra.mxu0 0
    %918 = vmatprep.subr.bf16.mxu0 0
    %919 = vmatpush1.bf16.msra.mxu0 0
    %920 = vmatprep.subr.bf16.mxu0 0
    %921 = vmatpush1.bf16.msra.mxu0 0
    %922 = vmatprep.mubr.bf16.mxu0 0
    %923 = vmatmul.mubr.bf16.gmra.mrb[0].mxu0 %v843
    %v924 = vpop.f32.mrb[0].mxu0
    %v925 = vadd.f32 0.0, %v924
    %v926 = vpop.f32.mrb[0].mxu0
    %v927 = vpop.f32.mrb[0].mxu0
    %v928 = vadd.f32 0.0, %v927
    %v929 = vpop.f32.mrb[0].mxu0
    %930 = vmatprep.mubr.bf16.mxu0 0
    %931 = vmatmul.mubr.bf16.gmra.mrb[0].mxu0 %v846
    %v932 = vpop.f32.mrb[0].mxu0
    %v933 = vadd.f32 0.0, %v932
    %v934 = vpop.f32.mrb[0].mxu0
    %v935 = vpop.f32.mrb[0].mxu0
    %v936 = vadd.f32 0.0, %v935
    %v937 = vpop.f32.mrb[0].mxu0
    %938 = vmatprep.mubr.bf16.mxu0 0
    %939 = vmatmul.mubr.bf16.gmra.mrb[0].mxu0 %v849
    %v940 = vpop.f32.mrb[0].mxu0
    %v941 = vadd.f32 0.0, %v940
    %v942 = vpop.f32.mrb[0].mxu0
    %v943 = vpop.f32.mrb[0].mxu0
    %v944 = vadd.f32 0.0, %v943
    %v945 = vpop.f32.mrb[0].mxu0
    %946 = vmatprep.mubr.bf16.mxu0 0
    %947 = vmatmul.mubr.bf16.gmra.mrb[0].mxu0 %v852
    %v948 = vpop.f32.mrb[0].mxu0
    %v949 = vadd.f32 0.0, %v948
    %v950 = vpop.f32.mrb[0].mxu0
    %v951 = vpop.f32.mrb[0].mxu0
    %v952 = vadd.f32 0.0, %v951
    %v953 = vpop.f32.mrb[0].mxu0
    %954 = vmatprep.mubr.bf16.mxu0 0
    %955 = vmatmul.mubr.bf16.gmra.mrb[0].mxu0 %v855
    %v956 = vpop.f32.mrb[0].mxu0
    %v957 = vadd.f32 0.0, %v956
    %v958 = vpop.f32.mrb[0].mxu0
    %v959 = vpop.f32.mrb[0].mxu0
    %v960 = vadd.f32 0.0, %v959
    %v961 = vpop.f32.mrb[0].mxu0
    %962 = vmatprep.mubr.bf16.mxu0 0
    %963 = vmatmul.mubr.bf16.gmra.mrb[0].mxu0 %v858
    %v964 = vpop.f32.mrb[0].mxu0
    %v965 = vadd.f32 0.0, %v964
    %v966 = vpop.f32.mrb[0].mxu0
    %v967 = vpop.f32.mrb[0].mxu0
    %v968 = vadd.f32 0.0, %v967
    %v969 = vpop.f32.mrb[0].mxu0
    %970 = vmatprep.mubr.bf16.mxu0 0
    %971 = vmatmul.mubr.bf16.gmra.mrb[0].mxu0 %v861
    %v972 = vpop.f32.mrb[0].mxu0
    %v973 = vadd.f32 0.0, %v972
    %v974 = vpop.f32.mrb[0].mxu0
    %v975 = vpop.f32.mrb[0].mxu0
    %v976 = vadd.f32 0.0, %v975
    %v977 = vpop.f32.mrb[0].mxu0
    %978 = vmatprep.mubr.bf16.mxu0 0
    %979 = vmatmul.mubr.bf16.gmra.mrb[0].mxu0 %v864
    %v980 = vpop.f32.mrb[0].mxu0
    %v981 = vadd.f32 0.0, %v980
    %v982 = vpop.f32.mrb[0].mxu0
    %v983 = vpop.f32.mrb[0].mxu0
    %v984 = vadd.f32 0.0, %v983
    %v985 = vpop.f32.mrb[0].mxu0
    %986 = vmatprep.mubr.bf16.mxu0 0
    %987 = vmatmul.mubr.bf16.gmra.mrb[0].mxu0 %v867
    %v988 = vpop.f32.mrb[0].mxu0
    %v989 = vadd.f32 0.0, %v988
    %v990 = vpop.f32.mrb[0].mxu0
    %v991 = vpop.f32.mrb[0].mxu0
    %v992 = vadd.f32 0.0, %v991
    %v993 = vpop.f32.mrb[0].mxu0
    %994 = vmatprep.mubr.bf16.mxu0 0
    %995 = vmatmul.mubr.bf16.gmra.mrb[0].mxu0 %v870
    %v996 = vpop.f32.mrb[0].mxu0
    %v997 = vadd.f32 0.0, %v996
    %v998 = vpop.f32.mrb[0].mxu0
    %v999 = vpop.f32.mrb[0].mxu0
    %v1000 = vadd.f32 0.0, %v999
    %v1001 = vpop.f32.mrb[0].mxu0
    %1002 = vmatprep.mubr.bf16.mxu0 0
    %1003 = vmatmul.mubr.bf16.gmra.mrb[0].mxu0 %v873
    %v1004 = vpop.f32.mrb[0].mxu0
    %v1005 = vadd.f32 0.0, %v1004
    %v1006 = vpop.f32.mrb[0].mxu0
    %v1007 = vpop.f32.mrb[0].mxu0
    %v1008 = vadd.f32 0.0, %v1007
    %v1009 = vpop.f32.mrb[0].mxu0
    %1010 = vmatprep.mubr.bf16.mxu0 0
    %1011 = vmatmul.mubr.bf16.gmra.mrb[0].mxu0 %v876
    %v1012 = vpop.f32.mrb[0].mxu0
    %v1013 = vadd.f32 0.0, %v1012
    %v1014 = vpop.f32.mrb[0].mxu0
    %v1015 = vpop.f32.mrb[0].mxu0
    %v1016 = vadd.f32 0.0, %v1015
    %v1017 = vpop.f32.mrb[0].mxu0
    %1018 = vmatprep.mubr.bf16.mxu0 0
    %1019 = vmatmul.mubr.bf16.gmra.mrb[0].mxu0 %v879
    %v1020 = vpop.f32.mrb[0].mxu0
    %v1021 = vadd.f32 0.0, %v1020
    %v1022 = vpop.f32.mrb[0].mxu0
    %v1023 = vpop.f32.mrb[0].mxu0
    %v1024 = vadd.f32 0.0, %v1023
    %v1025 = vpop.f32.mrb[0].mxu0
    %1026 = vmatprep.mubr.bf16.mxu0 0
    %1027 = vmatmul.mubr.bf16.gmra.mrb[0].mxu0 %v882
    %v1028 = vpop.f32.mrb[0].mxu0
    %v1029 = vadd.f32 0.0, %v1028
    %v1030 = vpop.f32.mrb[0].mxu0
    %v1031 = vpop.f32.mrb[0].mxu0
    %v1032 = vadd.f32 0.0, %v1031
    %v1033 = vpop.f32.mrb[0].mxu0
    %1034 = vmatprep.mubr.bf16.mxu0 0
    %1035 = vmatmul.mubr.bf16.gmra.mrb[0].mxu0 %v885
    %v1036 = vpop.f32.mrb[0].mxu0
    %v1037 = vadd.f32 0.0, %v1036
    %v1038 = vpop.f32.mrb[0].mxu0
    %v1039 = vpop.f32.mrb[0].mxu0
    %v1040 = vadd.f32 0.0, %v1039
    %v1041 = vpop.f32.mrb[0].mxu0
    %1042 = vmatprep.mubr.bf16.mxu0 0
    %1043 = vmatmul.mubr.bf16.gmra.mrb[0].mxu0 %v888
    %v1044 = vpop.f32.mrb[0].mxu0
    %v1045 = vadd.f32 0.0, %v1044
    %v1046 = vpop.f32.mrb[0].mxu0
    %v1047 = vpop.f32.mrb[0].mxu0
    %v1048 = vadd.f32 0.0, %v1047
    %v1049 = vpop.f32.mrb[0].mxu0
    %1050 = vdwg.mxu0
    %v1051 = vadd.f32 %v585, %v925
    %v1052 = vadd.f32 %v588, %v928
    %v1053 = vadd.f32 %v593, %v933
    %v1054 = vadd.f32 %v596, %v936
    %v1055 = vadd.f32 %v601, %v941
    %v1056 = vadd.f32 %v604, %v944
    %v1057 = vadd.f32 %v609, %v949
    %v1058 = vadd.f32 %v612, %v952
    %v1059 = vadd.f32 %v617, %v957
    %v1060 = vadd.f32 %v620, %v960
    %v1061 = vadd.f32 %v625, %v965
    %v1062 = vadd.f32 %v628, %v968
    %v1063 = vadd.f32 %v633, %v973
    %v1064 = vadd.f32 %v636, %v976
    %v1065 = vadd.f32 %v641, %v981
    %v1066 = vadd.f32 %v644, %v984
    %v1067 = vadd.f32 %v649, %v989
    %v1068 = vadd.f32 %v652, %v992
    %v1069 = vadd.f32 %v657, %v997
    %v1070 = vadd.f32 %v660, %v1000
    %v1071 = vadd.f32 %v665, %v1005
    %v1072 = vadd.f32 %v668, %v1008
    %v1073 = vadd.f32 %v673, %v1013
    %v1074 = vadd.f32 %v676, %v1016
    %v1075 = vadd.f32 %v681, %v1021
    %v1076 = vadd.f32 %v684, %v1024
    %v1077 = vadd.f32 %v689, %v1029
    %v1078 = vadd.f32 %v692, %v1032
    %v1079 = vadd.f32 %v697, %v1037
    %v1080 = vadd.f32 %v700, %v1040
    %v1081 = vadd.f32 %v705, %v1045
    %v1082 = vadd.f32 %v708, %v1048
    %v1083 = vld [vmem:[%s2] sm:$0xff]
    %v1084 = vld [vmem:[%s2 + $0x8] sm:$0xff]
    %v1085 = vld [vmem:[%s2 + $0x10] sm:$0xff]
    %v1086 = vld [vmem:[%s2 + $0x18] sm:$0xff]
    %v1087 = vld [vmem:[%s2 + $0x20] sm:$0xff]
    %v1088 = vld [vmem:[%s2 + $0x28] sm:$0xff]
    %v1089 = vld [vmem:[%s2 + $0x30] sm:$0xff]
    %v1090 = vld [vmem:[%s2 + $0x38] sm:$0xff]
    %v1091 = vld [vmem:[%s2 + $0x40] sm:$0xff]
    %v1092 = vld [vmem:[%s2 + $0x48] sm:$0xff]
    %v1093 = vld [vmem:[%s2 + $0x50] sm:$0xff]
    %v1094 = vld [vmem:[%s2 + $0x58] sm:$0xff]
    %v1095 = vld [vmem:[%s2 + $0x60] sm:$0xff]
    %v1096 = vld [vmem:[%s2 + $0x68] sm:$0xff]
    %v1097 = vld [vmem:[%s2 + $0x70] sm:$0xff]
    %v1098 = vld [vmem:[%s2 + $0x78] sm:$0xff]
    %v1099 = vld [vmem:[%s2 + $0x80] sm:$0xff]
    %v1100 = vld [vmem:[%s2 + $0x88] sm:$0xff]
    %v1101 = vld [vmem:[%s2 + $0x90] sm:$0xff]
    %v1102 = vld [vmem:[%s2 + $0x98] sm:$0xff]
    %v1103 = vld [vmem:[%s2 + $0xa0] sm:$0xff]
    %v1104 = vld [vmem:[%s2 + $0xa8] sm:$0xff]
    %v1105 = vld [vmem:[%s2 + $0xb0] sm:$0xff]
    %v1106 = vld [vmem:[%s2 + $0xb8] sm:$0xff]
    %v1107 = vld [vmem:[%s2 + $0xc0] sm:$0xff]
    %v1108 = vld [vmem:[%s2 + $0xc8] sm:$0xff]
    %v1109 = vld [vmem:[%s2 + $0xd0] sm:$0xff]
    %v1110 = vld [vmem:[%s2 + $0xd8] sm:$0xff]
    %v1111 = vld [vmem:[%s2 + $0xe0] sm:$0xff]
    %v1112 = vld [vmem:[%s2 + $0xe8] sm:$0xff]
    %v1113 = vld [vmem:[%s2 + $0xf0] sm:$0xff]
    %v1114 = vld [vmem:[%s2 + $0xf8] sm:$0xff]
    %1116 = vset.pattern.permute.xlu0 0
    %1117 = vperm.xlu0 %1116, %v1083
    %v1118 = vpop.permute.xlu0 %1117
    %1121 = vset.pattern.permute.xlu0 0
    %1122 = vperm.xlu0 %1121, %v1084
    %v1123 = vpop.permute.xlu0 %1122
    %1126 = vset.pattern.permute.xlu0 0
    %1127 = vperm.xlu0 %1126, %v1085
    %v1128 = vpop.permute.xlu0 %1127
    %1131 = vset.pattern.permute.xlu0 0
    %1132 = vperm.xlu0 %1131, %v1086
    %v1133 = vpop.permute.xlu0 %1132
    %1136 = vset.pattern.permute.xlu0 0
    %1137 = vperm.xlu0 %1136, %v1087
    %v1138 = vpop.permute.xlu0 %1137
    %1141 = vset.pattern.permute.xlu0 0
    %1142 = vperm.xlu0 %1141, %v1088
    %v1143 = vpop.permute.xlu0 %1142
    %1146 = vset.pattern.permute.xlu0 0
    %1147 = vperm.xlu0 %1146, %v1089
    %v1148 = vpop.permute.xlu0 %1147
    %1151 = vset.pattern.permute.xlu0 0
    %1152 = vperm.xlu0 %1151, %v1090
    %v1153 = vpop.permute.xlu0 %1152
    %1156 = vset.pattern.permute.xlu0 0
    %1157 = vperm.xlu0 %1156, %v1091
    %v1158 = vpop.permute.xlu0 %1157
    %1161 = vset.pattern.permute.xlu0 0
    %1162 = vperm.xlu0 %1161, %v1092
    %v1163 = vpop.permute.xlu0 %1162
    %1166 = vset.pattern.permute.xlu0 0
    %1167 = vperm.xlu0 %1166, %v1093
    %v1168 = vpop.permute.xlu0 %1167
    %1171 = vset.pattern.permute.xlu0 0
    %1172 = vperm.xlu0 %1171, %v1094
    %v1173 = vpop.permute.xlu0 %1172
    %1176 = vset.pattern.permute.xlu0 0
    %1177 = vperm.xlu0 %1176, %v1095
    %v1178 = vpop.permute.xlu0 %1177
    %1181 = vset.pattern.permute.xlu0 0
    %1182 = vperm.xlu0 %1181, %v1096
    %v1183 = vpop.permute.xlu0 %1182
    %1186 = vset.pattern.permute.xlu0 0
    %1187 = vperm.xlu0 %1186, %v1097
    %v1188 = vpop.permute.xlu0 %1187
    %1191 = vset.pattern.permute.xlu0 0
    %1192 = vperm.xlu0 %1191, %v1098
    %v1193 = vpop.permute.xlu0 %1192
    %1196 = vset.pattern.permute.xlu0 0
    %1197 = vperm.xlu0 %1196, %v1099
    %v1198 = vpop.permute.xlu0 %1197
    %1201 = vset.pattern.permute.xlu0 0
    %1202 = vperm.xlu0 %1201, %v1100
    %v1203 = vpop.permute.xlu0 %1202
    %1206 = vset.pattern.permute.xlu0 0
    %1207 = vperm.xlu0 %1206, %v1101
    %v1208 = vpop.permute.xlu0 %1207
    %1211 = vset.pattern.permute.xlu0 0
    %1212 = vperm.xlu0 %1211, %v1102
    %v1213 = vpop.permute.xlu0 %1212
    %1216 = vset.pattern.permute.xlu0 0
    %1217 = vperm.xlu0 %1216, %v1103
    %v1218 = vpop.permute.xlu0 %1217
    %1221 = vset.pattern.permute.xlu0 0
    %1222 = vperm.xlu0 %1221, %v1104
    %v1223 = vpop.permute.xlu0 %1222
    %1226 = vset.pattern.permute.xlu0 0
    %1227 = vperm.xlu0 %1226, %v1105
    %v1228 = vpop.permute.xlu0 %1227
    %1231 = vset.pattern.permute.xlu0 0
    %1232 = vperm.xlu0 %1231, %v1106
    %v1233 = vpop.permute.xlu0 %1232
    %1236 = vset.pattern.permute.xlu0 0
    %1237 = vperm.xlu0 %1236, %v1107
    %v1238 = vpop.permute.xlu0 %1237
    %1241 = vset.pattern.permute.xlu0 0
    %1242 = vperm.xlu0 %1241, %v1108
    %v1243 = vpop.permute.xlu0 %1242
    %1246 = vset.pattern.permute.xlu0 0
    %1247 = vperm.xlu0 %1246, %v1109
    %v1248 = vpop.permute.xlu0 %1247
    %1251 = vset.pattern.permute.xlu0 0
    %1252 = vperm.xlu0 %1251, %v1110
    %v1253 = vpop.permute.xlu0 %1252
    %1256 = vset.pattern.permute.xlu0 0
    %1257 = vperm.xlu0 %1256, %v1111
    %v1258 = vpop.permute.xlu0 %1257
    %1261 = vset.pattern.permute.xlu0 0
    %1262 = vperm.xlu0 %1261, %v1112
    %v1263 = vpop.permute.xlu0 %1262
    %1266 = vset.pattern.permute.xlu0 0
    %1267 = vperm.xlu0 %1266, %v1113
    %v1268 = vpop.permute.xlu0 %1267
    %1271 = vset.pattern.permute.xlu0 0
    %1272 = vperm.xlu0 %1271, %v1114
    %v1273 = vpop.permute.xlu0 %1272
    %v1275 = vmul.f32 %v1051, %v1118
    %v1276 = vmul.f32 %v1052, %v1123
    %v1277 = vmul.f32 %v1053, %v1128
    %v1278 = vmul.f32 %v1054, %v1133
    %v1279 = vmul.f32 %v1055, %v1138
    %v1280 = vmul.f32 %v1056, %v1143
    %v1281 = vmul.f32 %v1057, %v1148
    %v1282 = vmul.f32 %v1058, %v1153
    %v1283 = vmul.f32 %v1059, %v1158
    %v1284 = vmul.f32 %v1060, %v1163
    %v1285 = vmul.f32 %v1061, %v1168
    %v1286 = vmul.f32 %v1062, %v1173
    %v1287 = vmul.f32 %v1063, %v1178
    %v1288 = vmul.f32 %v1064, %v1183
    %v1289 = vmul.f32 %v1065, %v1188
    %v1290 = vmul.f32 %v1066, %v1193
    %v1291 = vmul.f32 %v1067, %v1198
    %v1292 = vmul.f32 %v1068, %v1203
    %v1293 = vmul.f32 %v1069, %v1208
    %v1294 = vmul.f32 %v1070, %v1213
    %v1295 = vmul.f32 %v1071, %v1218
    %v1296 = vmul.f32 %v1072, %v1223
    %v1297 = vmul.f32 %v1073, %v1228
    %v1298 = vmul.f32 %v1074, %v1233
    %v1299 = vmul.f32 %v1075, %v1238
    %v1300 = vmul.f32 %v1076, %v1243
    %v1301 = vmul.f32 %v1077, %v1248
    %v1302 = vmul.f32 %v1078, %v1253
    %v1303 = vmul.f32 %v1079, %v1258
    %v1304 = vmul.f32 %v1080, %v1263
    %v1305 = vmul.f32 %v1081, %v1268
    %v1306 = vmul.f32 %v1082, %v1273
    %v1307 = vld [vmem:[%s3] sm:$0xff]
    %v1308 = vld [vmem:[%s3 + $0x8] sm:$0xff]
    %v1309 = vld [vmem:[%s3 + $0x10] sm:$0xff]
    %v1310 = vld [vmem:[%s3 + $0x18] sm:$0xff]
    %v1311 = vld [vmem:[%s3 + $0x20] sm:$0xff]
    %v1312 = vld [vmem:[%s3 + $0x28] sm:$0xff]
    %v1313 = vld [vmem:[%s3 + $0x30] sm:$0xff]
    %v1314 = vld [vmem:[%s3 + $0x38] sm:$0xff]
    %v1315 = vld [vmem:[%s3 + $0x40] sm:$0xff]
    %v1316 = vld [vmem:[%s3 + $0x48] sm:$0xff]
    %v1317 = vld [vmem:[%s3 + $0x50] sm:$0xff]
    %v1318 = vld [vmem:[%s3 + $0x58] sm:$0xff]
    %v1319 = vld [vmem:[%s3 + $0x60] sm:$0xff]
    %v1320 = vld [vmem:[%s3 + $0x68] sm:$0xff]
    %v1321 = vld [vmem:[%s3 + $0x70] sm:$0xff]
    %v1322 = vld [vmem:[%s3 + $0x78] sm:$0xff]
    %v1323 = vld [vmem:[%s3 + $0x80] sm:$0xff]
    %v1324 = vld [vmem:[%s3 + $0x88] sm:$0xff]
    %v1325 = vld [vmem:[%s3 + $0x90] sm:$0xff]
    %v1326 = vld [vmem:[%s3 + $0x98] sm:$0xff]
    %v1327 = vld [vmem:[%s3 + $0xa0] sm:$0xff]
    %v1328 = vld [vmem:[%s3 + $0xa8] sm:$0xff]
    %v1329 = vld [vmem:[%s3 + $0xb0] sm:$0xff]
    %v1330 = vld [vmem:[%s3 + $0xb8] sm:$0xff]
    %v1331 = vld [vmem:[%s3 + $0xc0] sm:$0xff]
    %v1332 = vld [vmem:[%s3 + $0xc8] sm:$0xff]
    %v1333 = vld [vmem:[%s3 + $0xd0] sm:$0xff]
    %v1334 = vld [vmem:[%s3 + $0xd8] sm:$0xff]
    %v1335 = vld [vmem:[%s3 + $0xe0] sm:$0xff]
    %v1336 = vld [vmem:[%s3 + $0xe8] sm:$0xff]
    %v1337 = vld [vmem:[%s3 + $0xf0] sm:$0xff]
    %v1338 = vld [vmem:[%s3 + $0xf8] sm:$0xff]
    %1340 = vset.pattern.permute.xlu0 0
    %1341 = vperm.xlu0 %1340, %v1307
    %v1342 = vpop.permute.xlu0 %1341
    %1345 = vset.pattern.permute.xlu0 0
    %1346 = vperm.xlu0 %1345, %v1308
    %v1347 = vpop.permute.xlu0 %1346
    %1350 = vset.pattern.permute.xlu0 0
    %1351 = vperm.xlu0 %1350, %v1309
    %v1352 = vpop.permute.xlu0 %1351
    %1355 = vset.pattern.permute.xlu0 0
    %1356 = vperm.xlu0 %1355, %v1310
    %v1357 = vpop.permute.xlu0 %1356
    %1360 = vset.pattern.permute.xlu0 0
    %1361 = vperm.xlu0 %1360, %v1311
    %v1362 = vpop.permute.xlu0 %1361
    %1365 = vset.pattern.permute.xlu0 0
    %1366 = vperm.xlu0 %1365, %v1312
    %v1367 = vpop.permute.xlu0 %1366
    %1370 = vset.pattern.permute.xlu0 0
    %1371 = vperm.xlu0 %1370, %v1313
    %v1372 = vpop.permute.xlu0 %1371
    %1375 = vset.pattern.permute.xlu0 0
    %1376 = vperm.xlu0 %1375, %v1314
    %v1377 = vpop.permute.xlu0 %1376
    %1380 = vset.pattern.permute.xlu0 0
    %1381 = vperm.xlu0 %1380, %v1315
    %v1382 = vpop.permute.xlu0 %1381
    %1385 = vset.pattern.permute.xlu0 0
    %1386 = vperm.xlu0 %1385, %v1316
    %v1387 = vpop.permute.xlu0 %1386
    %1390 = vset.pattern.permute.xlu0 0
    %1391 = vperm.xlu0 %1390, %v1317
    %v1392 = vpop.permute.xlu0 %1391
    %1395 = vset.pattern.permute.xlu0 0
    %1396 = vperm.xlu0 %1395, %v1318
    %v1397 = vpop.permute.xlu0 %1396
    %1400 = vset.pattern.permute.xlu0 0
    %1401 = vperm.xlu0 %1400, %v1319
    %v1402 = vpop.permute.xlu0 %1401
    %1405 = vset.pattern.permute.xlu0 0
    %1406 = vperm.xlu0 %1405, %v1320
    %v1407 = vpop.permute.xlu0 %1406
    %1410 = vset.pattern.permute.xlu0 0
    %1411 = vperm.xlu0 %1410, %v1321
    %v1412 = vpop.permute.xlu0 %1411
    %1415 = vset.pattern.permute.xlu0 0
    %1416 = vperm.xlu0 %1415, %v1322
    %v1417 = vpop.permute.xlu0 %1416
    %1420 = vset.pattern.permute.xlu0 0
    %1421 = vperm.xlu0 %1420, %v1323
    %v1422 = vpop.permute.xlu0 %1421
    %1425 = vset.pattern.permute.xlu0 0
    %1426 = vperm.xlu0 %1425, %v1324
    %v1427 = vpop.permute.xlu0 %1426
    %1430 = vset.pattern.permute.xlu0 0
    %1431 = vperm.xlu0 %1430, %v1325
    %v1432 = vpop.permute.xlu0 %1431
    %1435 = vset.pattern.permute.xlu0 0
    %1436 = vperm.xlu0 %1435, %v1326
    %v1437 = vpop.permute.xlu0 %1436
    %1440 = vset.pattern.permute.xlu0 0
    %1441 = vperm.xlu0 %1440, %v1327
    %v1442 = vpop.permute.xlu0 %1441
    %1445 = vset.pattern.permute.xlu0 0
    %1446 = vperm.xlu0 %1445, %v1328
    %v1447 = vpop.permute.xlu0 %1446
    %1450 = vset.pattern.permute.xlu0 0
    %1451 = vperm.xlu0 %1450, %v1329
    %v1452 = vpop.permute.xlu0 %1451
    %1455 = vset.pattern.permute.xlu0 0
    %1456 = vperm.xlu0 %1455, %v1330
    %v1457 = vpop.permute.xlu0 %1456
    %1460 = vset.pattern.permute.xlu0 0
    %1461 = vperm.xlu0 %1460, %v1331
    %v1462 = vpop.permute.xlu0 %1461
    %1465 = vset.pattern.permute.xlu0 0
    %1466 = vperm.xlu0 %1465, %v1332
    %v1467 = vpop.permute.xlu0 %1466
    %1470 = vset.pattern.permute.xlu0 0
    %1471 = vperm.xlu0 %1470, %v1333
    %v1472 = vpop.permute.xlu0 %1471
    %1475 = vset.pattern.permute.xlu0 0
    %1476 = vperm.xlu0 %1475, %v1334
    %v1477 = vpop.permute.xlu0 %1476
    %1480 = vset.pattern.permute.xlu0 0
    %1481 = vperm.xlu0 %1480, %v1335
    %v1482 = vpop.permute.xlu0 %1481
    %1485 = vset.pattern.permute.xlu0 0
    %1486 = vperm.xlu0 %1485, %v1336
    %v1487 = vpop.permute.xlu0 %1486
    %1490 = vset.pattern.permute.xlu0 0
    %1491 = vperm.xlu0 %1490, %v1337
    %v1492 = vpop.permute.xlu0 %1491
    %1495 = vset.pattern.permute.xlu0 0
    %1496 = vperm.xlu0 %1495, %v1338
    %v1497 = vpop.permute.xlu0 %1496
    %v1499 = vadd.f32 %v1275, %v1342
    %v1500 = vadd.f32 %v1276, %v1347
    %v1501 = vadd.f32 %v1277, %v1352
    %v1502 = vadd.f32 %v1278, %v1357
    %v1503 = vadd.f32 %v1279, %v1362
    %v1504 = vadd.f32 %v1280, %v1367
    %v1505 = vadd.f32 %v1281, %v1372
    %v1506 = vadd.f32 %v1282, %v1377
    %v1507 = vadd.f32 %v1283, %v1382
    %v1508 = vadd.f32 %v1284, %v1387
    %v1509 = vadd.f32 %v1285, %v1392
    %v1510 = vadd.f32 %v1286, %v1397
    %v1511 = vadd.f32 %v1287, %v1402
    %v1512 = vadd.f32 %v1288, %v1407
    %v1513 = vadd.f32 %v1289, %v1412
    %v1514 = vadd.f32 %v1290, %v1417
    %v1515 = vadd.f32 %v1291, %v1422
    %v1516 = vadd.f32 %v1292, %v1427
    %v1517 = vadd.f32 %v1293, %v1432
    %v1518 = vadd.f32 %v1294, %v1437
    %v1519 = vadd.f32 %v1295, %v1442
    %v1520 = vadd.f32 %v1296, %v1447
    %v1521 = vadd.f32 %v1297, %v1452
    %v1522 = vadd.f32 %v1298, %v1457
    %v1523 = vadd.f32 %v1299, %v1462
    %v1524 = vadd.f32 %v1300, %v1467
    %v1525 = vadd.f32 %v1301, %v1472
    %v1526 = vadd.f32 %v1302, %v1477
    %v1527 = vadd.f32 %v1303, %v1482
    %v1528 = vadd.f32 %v1304, %v1487
    %v1529 = vadd.f32 %v1305, %v1492
    %v1530 = vadd.f32 %v1306, %v1497
    %v1531 = vtanh.pop %v1499
    %v1532 = vtanh.pop %v1500
    %v1533 = vtanh.pop %v1501
    %v1534 = vtanh.pop %v1502
    %v1535 = vtanh.pop %v1503
    %v1536 = vtanh.pop %v1504
    %v1537 = vtanh.pop %v1505
    %v1538 = vtanh.pop %v1506
    %v1539 = vtanh.pop %v1507
    %v1540 = vtanh.pop %v1508
    %v1541 = vtanh.pop %v1509
    %v1542 = vtanh.pop %v1510
    %v1543 = vtanh.pop %v1511
    %v1544 = vtanh.pop %v1512
    %v1545 = vtanh.pop %v1513
    %v1546 = vtanh.pop %v1514
    %v1547 = vtanh.pop %v1515
    %v1548 = vtanh.pop %v1516
    %v1549 = vtanh.pop %v1517
    %v1550 = vtanh.pop %v1518
    %v1551 = vtanh.pop %v1519
    %v1552 = vtanh.pop %v1520
    %v1553 = vtanh.pop %v1521
    %v1554 = vtanh.pop %v1522
    %v1555 = vtanh.pop %v1523
    %v1556 = vtanh.pop %v1524
    %v1557 = vtanh.pop %v1525
    %v1558 = vtanh.pop %v1526
    %v1559 = vtanh.pop %v1527
    %v1560 = vtanh.pop %v1528
    %v1561 = vtanh.pop %v1529
    %v1562 = vtanh.pop %v1530
    %v1563 = vld [vmem:[%s4] sm:$0xff]
    %v1564 = vld [vmem:[%s4 + $0x8] sm:$0xff]
    %v1565 = vld [vmem:[%s4 + $0x10] sm:$0xff]
    %v1566 = vld [vmem:[%s4 + $0x18] sm:$0xff]
    %v1567 = vld [vmem:[%s4 + $0x20] sm:$0xff]
    %v1568 = vld [vmem:[%s4 + $0x28] sm:$0xff]
    %v1569 = vld [vmem:[%s4 + $0x30] sm:$0xff]
    %v1570 = vld [vmem:[%s4 + $0x38] sm:$0xff]
    %v1571 = vld [vmem:[%s4 + $0x40] sm:$0xff]
    %v1572 = vld [vmem:[%s4 + $0x48] sm:$0xff]
    %v1573 = vld [vmem:[%s4 + $0x50] sm:$0xff]
    %v1574 = vld [vmem:[%s4 + $0x58] sm:$0xff]
    %v1575 = vld [vmem:[%s4 + $0x60] sm:$0xff]
    %v1576 = vld [vmem:[%s4 + $0x68] sm:$0xff]
    %v1577 = vld [vmem:[%s4 + $0x70] sm:$0xff]
    %v1578 = vld [vmem:[%s4 + $0x78] sm:$0xff]
    %v1579 = vpack.c.bf16 %v1532, %v1531
    %v1580 = vpack.c.bf16 %v1534, %v1533
    %v1581 = vpack.c.bf16 %v1536, %v1535
    %v1582 = vpack.c.bf16 %v1538, %v1537
    %v1583 = vpack.c.bf16 %v1540, %v1539
    %v1584 = vpack.c.bf16 %v1542, %v1541
    %v1585 = vpack.c.bf16 %v1544, %v1543
    %v1586 = vpack.c.bf16 %v1546, %v1545
    %v1587 = vpack.c.bf16 %v1548, %v1547
    %v1588 = vpack.c.bf16 %v1550, %v1549
    %v1589 = vpack.c.bf16 %v1552, %v1551
    %v1590 = vpack.c.bf16 %v1554, %v1553
    %v1591 = vpack.c.bf16 %v1556, %v1555
    %v1592 = vpack.c.bf16 %v1558, %v1557
    %v1593 = vpack.c.bf16 %v1560, %v1559
    %v1594 = vpack.c.bf16 %v1562, %v1561
    %v1595 = vld [vmem:[%s5] sm:$0xff]
    %v1596 = vld [vmem:[%s5 + $0x8] sm:$0xff]
    %v1597 = vld [vmem:[%s5 + $0x10] sm:$0xff]
    %v1598 = vld [vmem:[%s5 + $0x18] sm:$0xff]
    %v1599 = vld [vmem:[%s5 + $0x20] sm:$0xff]
    %v1600 = vld [vmem:[%s5 + $0x28] sm:$0xff]
    %v1601 = vld [vmem:[%s5 + $0x30] sm:$0xff]
    %v1602 = vld [vmem:[%s5 + $0x38] sm:$0xff]
    %v1603 = vld [vmem:[%s5 + $0x40] sm:$0xff]
    %v1604 = vld [vmem:[%s5 + $0x48] sm:$0xff]
    %v1605 = vld [vmem:[%s5 + $0x50] sm:$0xff]
    %v1606 = vld [vmem:[%s5 + $0x58] sm:$0xff]
    %v1607 = vld [vmem:[%s5 + $0x60] sm:$0xff]
    %v1608 = vld [vmem:[%s5 + $0x68] sm:$0xff]
    %v1609 = vld [vmem:[%s5 + $0x70] sm:$0xff]
    %v1610 = vld [vmem:[%s5 + $0x78] sm:$0xff]
    %1612 = vset.pattern.permute.xlu0 0
    %1613 = vperm.xlu0 %1612, %v1595
    %v1614 = vpop.permute.xlu0 %1613
    %1617 = vset.pattern.permute.xlu0 0
    %1618 = vperm.xlu0 %1617, %v1596
    %v1619 = vpop.permute.xlu0 %1618
    %1622 = vset.pattern.permute.xlu0 0
    %1623 = vperm.xlu0 %1622, %v1597
    %v1624 = vpop.permute.xlu0 %1623
    %1627 = vset.pattern.permute.xlu0 0
    %1628 = vperm.xlu0 %1627, %v1598
    %v1629 = vpop.permute.xlu0 %1628
    %1632 = vset.pattern.permute.xlu0 0
    %1633 = vperm.xlu0 %1632, %v1599
    %v1634 = vpop.permute.xlu0 %1633
    %1637 = vset.pattern.permute.xlu0 0
    %1638 = vperm.xlu0 %1637, %v1600
    %v1639 = vpop.permute.xlu0 %1638
    %1642 = vset.pattern.permute.xlu0 0
    %1643 = vperm.xlu0 %1642, %v1601
    %v1644 = vpop.permute.xlu0 %1643
    %1647 = vset.pattern.permute.xlu0 0
    %1648 = vperm.xlu0 %1647, %v1602
    %v1649 = vpop.permute.xlu0 %1648
    %1652 = vset.pattern.permute.xlu0 0
    %1653 = vperm.xlu0 %1652, %v1603
    %v1654 = vpop.permute.xlu0 %1653
    %1657 = vset.pattern.permute.xlu0 0
    %1658 = vperm.xlu0 %1657, %v1604
    %v1659 = vpop.permute.xlu0 %1658
    %1662 = vset.pattern.permute.xlu0 0
    %1663 = vperm.xlu0 %1662, %v1605
    %v1664 = vpop.permute.xlu0 %1663
    %1667 = vset.pattern.permute.xlu0 0
    %1668 = vperm.xlu0 %1667, %v1606
    %v1669 = vpop.permute.xlu0 %1668
    %1672 = vset.pattern.permute.xlu0 0
    %1673 = vperm.xlu0 %1672, %v1607
    %v1674 = vpop.permute.xlu0 %1673
    %1677 = vset.pattern.permute.xlu0 0
    %1678 = vperm.xlu0 %1677, %v1608
    %v1679 = vpop.permute.xlu0 %1678
    %1682 = vset.pattern.permute.xlu0 0
    %1683 = vperm.xlu0 %1682, %v1609
    %v1684 = vpop.permute.xlu0 %1683
    %1687 = vset.pattern.permute.xlu0 0
    %1688 = vperm.xlu0 %1687, %v1610
    %v1689 = vpop.permute.xlu0 %1688
    %v1707 = vunpack.c.l.b16 %v1563
    %v1708 = vunpack.c.h.b16 %v1563
    %v1709 = vunpack.c.l.b16 %v1564
    %v1710 = vunpack.c.h.b16 %v1564
    %v1711 = vunpack.c.l.b16 %v1565
    %v1712 = vunpack.c.h.b16 %v1565
    %v1713 = vunpack.c.l.b16 %v1566
    %v1714 = vunpack.c.h.b16 %v1566
    %v1715 = vunpack.c.l.b16 %v1567
    %v1716 = vunpack.c.h.b16 %v1567
    %v1717 = vunpack.c.l.b16 %v1568
    %v1718 = vunpack.c.h.b16 %v1568
    %v1719 = vunpack.c.l.b16 %v1569
    %v1720 = vunpack.c.h.b16 %v1569
    %v1721 = vunpack.c.l.b16 %v1570
    %v1722 = vunpack.c.h.b16 %v1570
    %v1723 = vunpack.c.l.b16 %v1571
    %v1724 = vunpack.c.h.b16 %v1571
    %v1725 = vunpack.c.l.b16 %v1572
    %v1726 = vunpack.c.h.b16 %v1572
    %v1727 = vunpack.c.l.b16 %v1573
    %v1728 = vunpack.c.h.b16 %v1573
    %v1729 = vunpack.c.l.b16 %v1574
    %v1730 = vunpack.c.h.b16 %v1574
    %v1731 = vunpack.c.l.b16 %v1575
    %v1732 = vunpack.c.h.b16 %v1575
    %v1733 = vunpack.c.l.b16 %v1576
    %v1734 = vunpack.c.h.b16 %v1576
    %v1735 = vunpack.c.l.b16 %v1577
    %v1736 = vunpack.c.h.b16 %v1577
    %v1737 = vunpack.c.l.b16 %v1578
    %v1738 = vunpack.c.h.b16 %v1578
    %v1739 = vpack.c.b16 %v1709, %v1707
    %v1740 = vpack.c.b16 %v1710, %v1708
    %v1741 = vpack.c.b16 %v1713, %v1711
    %v1742 = vpack.c.b16 %v1714, %v1712
    %v1743 = vpack.c.b16 %v1717, %v1715
    %v1744 = vpack.c.b16 %v1718, %v1716
    %v1745 = vpack.c.b16 %v1721, %v1719
    %v1746 = vpack.c.b16 %v1722, %v1720
    %v1747 = vpack.c.b16 %v1725, %v1723
    %v1748 = vpack.c.b16 %v1726, %v1724
    %v1749 = vpack.c.b16 %v1729, %v1727
    %v1750 = vpack.c.b16 %v1730, %v1728
    %v1751 = vpack.c.b16 %v1733, %v1731
    %v1752 = vpack.c.b16 %v1734, %v1732
    %v1753 = vpack.c.b16 %v1737, %v1735
    %v1754 = vpack.c.b16 %v1738, %v1736
    %1771 = vmatprep.subr.bf16.mxu0 0
    %1772 = vmatpush1.bf16.msra.mxu0 %v1579
    %1773 = vmatprep.subr.bf16.mxu0 0
    %1774 = vmatpush1.bf16.msra.mxu0 %v1580
    %1775 = vmatprep.subr.bf16.mxu0 0
    %1776 = vmatpush1.bf16.msra.mxu0 %v1581
    %1777 = vmatprep.subr.bf16.mxu0 0
    %1778 = vmatpush1.bf16.msra.mxu0 %v1582
    %1779 = vmatprep.subr.bf16.mxu0 0
    %1780 = vmatpush1.bf16.msra.mxu0 %v1583
    %1781 = vmatprep.subr.bf16.mxu0 0
    %1782 = vmatpush1.bf16.msra.mxu0 %v1584
    %1783 = vmatprep.subr.bf16.mxu0 0
    %1784 = vmatpush1.bf16.msra.mxu0 %v1585
    %1785 = vmatprep.subr.bf16.mxu0 0
    %1786 = vmatpush1.bf16.msra.mxu0 %v1586
    %1787 = vmatprep.subr.bf16.mxu0 0
    %1788 = vmatpush1.bf16.msra.mxu0 %v1587
    %1789 = vmatprep.subr.bf16.mxu0 0
    %1790 = vmatpush1.bf16.msra.mxu0 %v1588
    %1791 = vmatprep.subr.bf16.mxu0 0
    %1792 = vmatpush1.bf16.msra.mxu0 %v1589
    %1793 = vmatprep.subr.bf16.mxu0 0
    %1794 = vmatpush1.bf16.msra.mxu0 %v1590
    %1795 = vmatprep.subr.bf16.mxu0 0
    %1796 = vmatpush1.bf16.msra.mxu0 %v1591
    %1797 = vmatprep.subr.bf16.mxu0 0
    %1798 = vmatpush1.bf16.msra.mxu0 %v1592
    %1799 = vmatprep.subr.bf16.mxu0 0
    %1800 = vmatpush1.bf16.msra.mxu0 %v1593
    %1801 = vmatprep.subr.bf16.mxu0 0
    %1802 = vmatpush1.bf16.msra.mxu0 %v1594
    %1803 = vmatprep.mubr.bf16.mxu0 %v1740
    %1804 = vmatmul.mubr.bf16.gmra.mrb[0].mxu0 %v1739
    %v1805 = vpop.f32.mrb[0].mxu0
    %v1806 = vadd.f32 %v1614, %v1805
    %v1807 = vpop.f32.mrb[0].mxu0
    %v1808 = vpop.f32.mrb[0].mxu0
    %v1809 = vadd.f32 %v1619, %v1808
    %v1810 = vpop.f32.mrb[0].mxu0
    %1811 = vmatprep.mubr.bf16.mxu0 %v1742
    %1812 = vmatmul.mubr.bf16.gmra.mrb[0].mxu0 %v1741
    %v1813 = vpop.f32.mrb[0].mxu0
    %v1814 = vadd.f32 %v1624, %v1813
    %v1815 = vpop.f32.mrb[0].mxu0
    %v1816 = vpop.f32.mrb[0].mxu0
    %v1817 = vadd.f32 %v1629, %v1816
    %v1818 = vpop.f32.mrb[0].mxu0
    %1819 = vmatprep.mubr.bf16.mxu0 %v1744
    %1820 = vmatmul.mubr.bf16.gmra.mrb[0].mxu0 %v1743
    %v1821 = vpop.f32.mrb[0].mxu0
    %v1822 = vadd.f32 %v1634, %v1821
    %v1823 = vpop.f32.mrb[0].mxu0
    %v1824 = vpop.f32.mrb[0].mxu0
    %v1825 = vadd.f32 %v1639, %v1824
    %v1826 = vpop.f32.mrb[0].mxu0
    %1827 = vmatprep.mubr.bf16.mxu0 %v1746
    %1828 = vmatmul.mubr.bf16.gmra.mrb[0].mxu0 %v1745
    %v1829 = vpop.f32.mrb[0].mxu0
    %v1830 = vadd.f32 %v1644, %v1829
    %v1831 = vpop.f32.mrb[0].mxu0
    %v1832 = vpop.f32.mrb[0].mxu0
    %v1833 = vadd.f32 %v1649, %v1832
    %v1834 = vpop.f32.mrb[0].mxu0
    %1835 = vmatprep.mubr.bf16.mxu0 %v1748
    %1836 = vmatmul.mubr.bf16.gmra.mrb[0].mxu0 %v1747
    %v1837 = vpop.f32.mrb[0].mxu0
    %v1838 = vadd.f32 %v1654, %v1837
    %v1839 = vpop.f32.mrb[0].mxu0
    %v1840 = vpop.f32.mrb[0].mxu0
    %v1841 = vadd.f32 %v1659, %v1840
    %v1842 = vpop.f32.mrb[0].mxu0
    %1843 = vmatprep.mubr.bf16.mxu0 %v1750
    %1844 = vmatmul.mubr.bf16.gmra.mrb[0].mxu0 %v1749
    %v1845 = vpop.f32.mrb[0].mxu0
    %v1846 = vadd.f32 %v1664, %v1845
    %v1847 = vpop.f32.mrb[0].mxu0
    %v1848 = vpop.f32.mrb[0].mxu0
    %v1849 = vadd.f32 %v1669, %v1848
    %v1850 = vpop.f32.mrb[0].mxu0
    %1851 = vmatprep.mubr.bf16.mxu0 %v1752
    %1852 = vmatmul.mubr.bf16.gmra.mrb[0].mxu0 %v1751
    %v1853 = vpop.f32.mrb[0].mxu0
    %v1854 = vadd.f32 %v1674, %v1853
    %v1855 = vpop.f32.mrb[0].mxu0
    %v1856 = vpop.f32.mrb[0].mxu0
    %v1857 = vadd.f32 %v1679, %v1856
    %v1858 = vpop.f32.mrb[0].mxu0
    %1859 = vmatprep.mubr.bf16.mxu0 %v1754
    %1860 = vmatmul.mubr.bf16.gmra.mrb[0].mxu0 %v1753
    %v1861 = vpop.f32.mrb[0].mxu0
    %v1862 = vadd.f32 %v1684, %v1861
    %v1863 = vpop.f32.mrb[0].mxu0
    %v1864 = vpop.f32.mrb[0].mxu0
    %v1865 = vadd.f32 %v1689, %v1864
    %v1866 = vpop.f32.mrb[0].mxu0
    %1867 = vdwg.mxu0
    %1868 = vst [vmem:[#allocation2] sm:$0xff] %v1806
    %1869 = vst [vmem:[#allocation2 + $0x8] sm:$0xff] %v1809
    %1870 = vst [vmem:[#allocation2 + $0x10] sm:$0xff] %v1814
    %1871 = vst [vmem:[#allocation2 + $0x18] sm:$0xff] %v1817
    %1872 = vst [vmem:[#allocation2 + $0x20] sm:$0xff] %v1822
    %1873 = vst [vmem:[#allocation2 + $0x28] sm:$0xff] %v1825
    %1874 = vst [vmem:[#allocation2 + $0x30] sm:$0xff] %v1830
    %1875 = vst [vmem:[#allocation2 + $0x38] sm:$0xff] %v1833
    %1876 = vst [vmem:[#allocation2 + $0x40] sm:$0xff] %v1838
    %1877 = vst [vmem:[#allocation2 + $0x48] sm:$0xff] %v1841
    %1878 = vst [vmem:[#allocation2 + $0x50] sm:$0xff] %v1846
    %1879 = vst [vmem:[#allocation2 + $0x58] sm:$0xff] %v1849
    %1880 = vst [vmem:[#allocation2 + $0x60] sm:$0xff] %v1854
    %1881 = vst [vmem:[#allocation2 + $0x68] sm:$0xff] %v1857
    %1882 = vst [vmem:[#allocation2 + $0x70] sm:$0xff] %v1862
    %1883 = vst [vmem:[#allocation2 + $0x78] sm:$0xff] %v1865
    // Predicated region
    $region26: #{tpu_custom_call.1} parent=1 // pred_check
      _
    $region27: #{tpu_custom_call.1} parent=1 // pred_check_branch
      %1885 = sbr.rel (0) target = $region29
    $region28: #{tpu_custom_call.1} parent=1 // pred_region
      %s1887 = ssub.s32 2048, 2048
      %1888 = vsyncadd [#allocation3], %s1887
      %s1889 = sshll.u32 [#allocation2], 4
      %s1890 = int_to_ptr.vmem [resolvable:$true] %s1889
      %1895 = dma.vmem_to_hbm [thread:$0]  %s1890, 2048, %s6, [#allocation3], 128, 128, 8
    $region29: #{tpu_custom_call.1} parent=1 // pred_fallthru
      _
    // Predicated region
    $region30: #{tpu_custom_call.1} parent=1 // pred_check
      _
    $region31: #{tpu_custom_call.1} parent=1 // pred_check_branch
      %1897 = sbr.rel (0) target = $region33
    $region32: #{tpu_custom_call.1} parent=1 // pred_region
      %1898 = dma.done [#allocation3], 2048
    $region33: #{tpu_custom_call.1} parent=1 // pred_fallthru
      _
    %1899 = vsyncpa [#allocation3], 1

</llo_original>
